<compile_context>
chip_gen: v6e
topology: v6e:2x2x1
jax: 0.10.0
libtpu: 0.0.40
codegen_flags: <defaults>
</compile_context>

<pallas_src>
import math
from functools import partial

import jax
import jax.numpy as jnp
from jax.experimental import pallas as pl
from jax.experimental.pallas import tpu as pltpu

F32 = jnp.float32
HIGHEST = jax.lax.Precision.HIGHEST


def _round_up(n, m):
    return ((n + m - 1) // m) * m


# ------------------------------- kernel ------------------------------------
def cond_linear_kernel(act_ref, const_ref, o_ref, *, d_in_p, d_out, d_seed_p, lanes):
    """Fused CondLinear forward for the whole batch in one shot.

    act_ref   : (B, d_in_p + d_seed_p)   [x (zero-padded) | seed (zero-padded)]
    const_ref : (d_seed_p + d_in_p + lanes + d_seed_p, lanes)
        rows [0            : d_seed_p]           = W_op flattened^T (zero-padded)
        rows [d_seed_p     : d_seed_p+d_in_p]    = EXPAND 0/1 matrix
        rows [.. : ..+lanes]                     = REDUCE 0/1 matrix (zero-padded)
        rows [..+lanes : ..+lanes+d_seed_p]      = W_bias^T (zero-padded; zeros if no bias)
    o_ref     : (B, d_out)
    """
    act = act_ref[...]                                  # (B, d_in_p + d_seed_p)
    x_p = act[:, 0:d_in_p]                              # (B, d_in_p)
    seed_p = act[:, d_in_p:d_in_p + d_seed_p]           # (B, d_seed_p)

    r1 = d_seed_p
    r2 = r1 + d_in_p
    wop = const_ref[0:r1, :]                            # (d_seed_p, lanes)
    expand = const_ref[r1:r2, :]                        # (d_in_p,  lanes)
    rb = const_ref[r2:r2 + lanes + d_seed_p, :]         # (lanes + d_seed_p, lanes)

    # Per-example conditional weight, flattened on the lane axis:
    #   w_all[b, i*d_out + o] = sum_s seed[b, s] * W_op[i, o, s]
    w_all = jnp.dot(seed_p, wop, precision=HIGHEST,
                    preferred_element_type=F32)         # (B, lanes)

    # Broadcast input across each d_out-sized group via a constant 0/1 matmul:
    #   x_exp[b, i*d_out + o] = input[b, i]
    x_exp = jnp.dot(x_p, expand, precision=HIGHEST,
                    preferred_element_type=F32)         # (B, lanes)

    prod = x_exp * w_all                                # (B, lanes)

    # One fused matmul does BOTH the group-reduce over i AND the bias:
    #   [prod | seed] @ [REDUCE ; 0 ; W_bias^T ; 0]
    # lanes is a multiple of 128, so the concat sits on a vreg boundary.
    op = jnp.concatenate([prod, seed_p], axis=1)        # (B, lanes + d_seed_p)
    res = jnp.dot(op, rb, precision=HIGHEST,
                  preferred_element_type=F32)           # (B, lanes)

    o_ref[...] = res[:, 0:d_out]                        # (B, d_out)


# ------------------------------ host-side packing ---------------------------
def pack_cond_linear_params(W_op, W_bias=None):
    """Pack ALL constants into one lane-dense, sublane-aligned slab."""
    d_in, d_out, d_seed = W_op.shape
    dio = d_in * d_out
    d_in_p = _round_up(d_in, 8)
    d_seed_p = _round_up(d_seed, 8)
    lanes = _round_up(max(dio, d_out), 128)

    # Matches torch: F.linear(seed, W_op.reshape(-1, d_seed)) == seed @ wop_flat
    wop_flat = jnp.asarray(W_op, F32).reshape(dio, d_seed).T       # (d_seed, dio)
    wop_blk = jnp.zeros((d_seed_p, lanes), F32).at[:d_seed, :dio].set(wop_flat)

    # EXPAND[i, i*d_out + o] = 1
    expand = jnp.repeat(jnp.eye(d_in, dtype=F32), d_out, axis=1)   # (d_in, dio)
    exp_blk = jnp.zeros((d_in_p, lanes), F32).at[:d_in, :dio].set(expand)

    # REDUCE[i*d_out + o, o'] = (o == o'), padded to full lane width
    reduce_m = jnp.tile(jnp.eye(d_out, dtype=F32), (d_in, 1))      # (dio, d_out)
    red_blk = jnp.zeros((lanes, lanes), F32).at[:dio, :d_out].set(reduce_m)

    # Bias rows (zeros when bias is absent -> no branch needed in the kernel)
    bias_blk = jnp.zeros((d_seed_p, lanes), F32)
    if W_bias is not None:
        bias_blk = bias_blk.at[:d_seed, :d_out].set(jnp.asarray(W_bias, F32).T)

    const_pack = jnp.concatenate([wop_blk, exp_blk, red_blk, bias_blk], axis=0)
    meta = dict(d_in=d_in, d_out=d_out, d_seed=d_seed,
                d_in_p=d_in_p, d_seed_p=d_seed_p, lanes=lanes)
    return const_pack, meta


def pack_activations(x, seed, meta):
    """Pack x and seed into one (B, d_in_p + d_seed_p) activation slab."""
    b = x.shape[0]
    d_in, d_seed = meta["d_in"], meta["d_seed"]
    d_in_p, d_seed_p = meta["d_in_p"], meta["d_seed_p"]
    act = jnp.zeros((b, d_in_p + d_seed_p), F32)
    act = act.at[:, :d_in].set(x.astype(F32))
    act = act.at[:, d_in_p:d_in_p + d_seed].set(seed.astype(F32))
    return act


# ------------------------------ pallas wrapper ------------------------------
@partial(jax.jit, static_argnames=("d_in_p", "d_out", "d_seed_p", "lanes"))
def _cond_linear_packed(act, const_pack, *, d_in_p, d_out, d_seed_p, lanes):
    b = act.shape[0]
    kernel = partial(cond_linear_kernel, d_in_p=d_in_p, d_out=d_out,
                     d_seed_p=d_seed_p, lanes=lanes)
    vmem = pl.BlockSpec(memory_space=pltpu.MemorySpace.VMEM)
    flops = 2 * b * lanes * (d_seed_p + d_in_p + lanes + d_seed_p) + b * lanes
    bytes_accessed = 4 * (act.size + const_pack.size + b * d_out)
    return pl.pallas_call(
        kernel,
        out_shape=jax.ShapeDtypeStruct((b, d_out), F32),
        in_specs=[vmem, vmem],
        out_specs=vmem,
        cost_estimate=pl.CostEstimate(flops=flops, transcendentals=0,
                                      bytes_accessed=bytes_accessed),
    )(act, const_pack)


def cond_linear(x, seed, const_pack, meta):
    act = pack_activations(x, seed, meta)
    return _cond_linear_packed(act, const_pack,
                               d_in_p=meta["d_in_p"], d_out=meta["d_out"],
                               d_seed_p=meta["d_seed_p"], lanes=meta["lanes"])


# ------------------------------ pure-JAX reference ---------------------------
def cond_linear_ref(x, seed, W_op, W_bias=None):
    d_in, d_out, d_seed = W_op.shape
    W = jnp.dot(seed, W_op.reshape(-1, d_seed).T, precision=HIGHEST)
    W = W.reshape(-1, d_in, d_out)                  # (B, d_in, d_out)
    out = jnp.einsum('bi,bio->bo', x, W, precision=HIGHEST)
    if W_bias is not None:
        out = out + jnp.dot(seed, W_bias.T, precision=HIGHEST)
    return out


# ----------------------------------- main ------------------------------------
if __name__ == "__main__":
    B, D_IN, D_OUT, D_SEED = 2, 8, 16, 16           # d_in*d_out = 128 (one lane width)

    key = jax.random.PRNGKey(0)
    kx, ks, kw, kb = jax.random.split(key, 4)

    x = jax.random.normal(kx, (B, D_IN), F32)
    seed_vec = jax.random.normal(ks, (B, D_SEED), F32)

    # kaiming_uniform_(a=sqrt(5))-style bound for W_op; uniform(+-1/sqrt(50)) for W_bias
    bound_w = 1.0 / math.sqrt(D_OUT * D_SEED)
    W_op = jax.random.uniform(kw, (D_IN, D_OUT, D_SEED), F32, -bound_w, bound_w)
    bound_b = 1.0 / math.sqrt(50.0)
    W_bias = jax.random.uniform(kb, (D_OUT, D_SEED), F32, -bound_b, bound_b)

    const_pack, meta = pack_cond_linear_params(W_op, W_bias)

    out = cond_linear(x, seed_vec, const_pack, meta)
    out = jax.block_until_ready(out)

    ref = cond_linear_ref(x, seed_vec, W_op, W_bias)

    assert out.shape == (B, D_OUT)
    assert bool(jnp.all(jnp.isfinite(out)))
    assert bool(jnp.allclose(out, ref, rtol=1e-5, atol=1e-5)), "mismatch vs reference"
    print("KERNEL_OK")
</pallas_src>

<mosaic_0001>
module attributes {stable_mosaic.version = 11 : i64} {
  func.func @cond_linear_kernel(%arg0: memref<2x24xf32, #tpu.memory_space<vmem>>, %arg1: memref<168x128xf32, #tpu.memory_space<vmem>>, %arg2: memref<2x16xf32, #tpu.memory_space<vmem>>) attributes {dimension_semantics = [], scalar_prefetch = 0 : i64, scratch_operands = 0 : i64, tpu.core_type = #tpu.core_type<tc>} {
    %c0 = arith.constant 0 : index
    %c0_0 = arith.constant 0 : index
    %0 = vector.load %arg0[%c0, %c0_0] : memref<2x24xf32, #tpu.memory_space<vmem>>, vector<2x24xf32>
    %1 = vector.extract_strided_slice %0 {offsets = [0, 0], sizes = [2, 8], strides = [1, 1]} : vector<2x24xf32> to vector<2x8xf32>
    %2 = vector.extract_strided_slice %0 {offsets = [0, 8], sizes = [2, 16], strides = [1, 1]} : vector<2x24xf32> to vector<2x16xf32>
    %c0_1 = arith.constant 0 : index
    %c0_2 = arith.constant 0 : index
    %3 = vector.load %arg1[%c0_1, %c0_2] : memref<168x128xf32, #tpu.memory_space<vmem>>, vector<16x128xf32>
    %c16 = arith.constant 16 : index
    %c0_3 = arith.constant 0 : index
    %4 = vector.load %arg1[%c16, %c0_3] : memref<168x128xf32, #tpu.memory_space<vmem>>, vector<8x128xf32>
    %c24 = arith.constant 24 : index
    %c0_4 = arith.constant 0 : index
    %5 = vector.load %arg1[%c24, %c0_4] : memref<168x128xf32, #tpu.memory_space<vmem>>, vector<144x128xf32>
    %cst = arith.constant dense<0.000000e+00> : vector<2x128xf32>
    %6 = tpu.matmul %2, %3, %cst {dimension_numbers = #tpu.dot_dimension_numbers<[1], [0], [0], [1], [0, 0, 1, 1], [], []>, precision = #tpu.contract_precision<fp32>} : vector<2x16xf32>, vector<16x128xf32>, vector<2x128xf32> -> vector<2x128xf32>
    %cst_5 = arith.constant dense<0.000000e+00> : vector<2x128xf32>
    %7 = tpu.matmul %1, %4, %cst_5 {dimension_numbers = #tpu.dot_dimension_numbers<[1], [0], [0], [1], [0, 0, 1, 1], [], []>, precision = #tpu.contract_precision<fp32>} : vector<2x8xf32>, vector<8x128xf32>, vector<2x128xf32> -> vector<2x128xf32>
    %8 = arith.mulf %7, %6 : vector<2x128xf32>
    %9 = tpu.concatenate %8, %2 in 1 : vector<2x128xf32>, vector<2x16xf32> -> vector<2x144xf32>
    %cst_6 = arith.constant dense<0.000000e+00> : vector<2x128xf32>
    %10 = tpu.matmul %9, %5, %cst_6 {dimension_numbers = #tpu.dot_dimension_numbers<[1], [0], [0], [1], [0, 0, 1, 1], [], []>, precision = #tpu.contract_precision<fp32>} : vector<2x144xf32>, vector<144x128xf32>, vector<2x128xf32> -> vector<2x128xf32>
    %11 = vector.extract_strided_slice %10 {offsets = [0, 0], sizes = [2, 16], strides = [1, 1]} : vector<2x128xf32> to vector<2x16xf32>
    %c0_7 = arith.constant 0 : index
    %c0_8 = arith.constant 0 : index
    %12 = vector.load %arg2[%c0_7, %c0_8] : memref<2x16xf32, #tpu.memory_space<vmem>>, vector<2x16xf32>
    tpu.vector_store %arg2[%c0_7, %c0_8], %11 {strides = array<i32>} : memref<2x16xf32, #tpu.memory_space<vmem>>, vector<2x16xf32>,
    return
  }
}

</mosaic_0001>

<llo_original>
// kernel: _cond_linear_packed.1
$region0: #{_cond_linear_packed.1}
  #allocation0 [shape = 'u32[]', space=smem, size = 0x4, offset = 0x4, fixed_abs, tag = 'smem constant byte address 0x4 - core index']
  #allocation1 [shape = 'u32[144,128]{1,0:T(1,128)}', space=vmem, size = 0x12000, scoped, tag = 'internal scratch']
  %s0 = inlined_call_operand.hbm [shape: f32[2,24], index: 0, kind: input, shape index: {}]
  %s1 = inlined_call_operand.hbm [shape: f32[168,128], index: 1, kind: input, shape index: {}]
  %s2 = inlined_call_operand.hbm [shape: f32[2,16], index: 2, kind: output, shape index: {}]
  %s3 = sld [smem:[#allocation0]]
  $region26: #{_cond_linear_packed.1} parent=0
    _
  %s5 = ssub.s32 1, %s3
  %s6 = scalar_select 0, %s5, %s3
  $region1: #{_cond_linear_packed.1} parent=0
    #allocation2 [shape = 'u8[1024]{0}', space=vmem, size = 0x400, scoped, tag = 'input window, operand 0, single buffered']
    #allocation3 [shape = 's32[1]{0}', space=sflag, size = 0x4, scoped, tag = 'scoped memory for _cond_linear_packed.1']
    #allocation4 [shape = 's32[1]{0}', space=sflag, size = 0x4, scoped, tag = 'scoped memory for _cond_linear_packed.1']
    #allocation5 [shape = 'u8[86016]{0}', space=vmem, size = 0x15000, scoped, tag = 'input window, operand 1, single buffered']
    #allocation6 [shape = 's32[1]{0}', space=sflag, size = 0x4, scoped, tag = 'scoped memory for _cond_linear_packed.1']
    #allocation7 [shape = 'u8[1024]{0}', space=vmem, size = 0x400, scoped, tag = 'output window, operand 0, single buffered']
    %7 = vsyncpa [#allocation3], 0
    %8 = vsyncpa [#allocation6], 0
    %9 = vsyncpa [#allocation4], 0
    // Predicated region
    $region2: #{_cond_linear_packed.1} parent=1 // pred_check
      _
    $region3: #{_cond_linear_packed.1} parent=1 // pred_check_branch
      %11 = sbr.rel (0) target = $region5
    $region4: #{_cond_linear_packed.1} parent=1 // pred_region
      %s13 = ssub.s32 32, 32
      %14 = vsyncadd [#allocation3], %s13
      %s16 = sshll.u32 [#allocation2], 4
      %s17 = int_to_ptr.vmem [resolvable:$true] %s16
      %19 = dma.hbm_to_vmem [thread:$0]  %s0, 32, %s17, [#allocation3]
    $region5: #{_cond_linear_packed.1} parent=1 // pred_fallthru
      _
    // Predicated region
    $region6: #{_cond_linear_packed.1} parent=1 // pred_check
      _
    $region7: #{_cond_linear_packed.1} parent=1 // pred_check_branch
      %21 = sbr.rel (0) target = $region9
    $region8: #{_cond_linear_packed.1} parent=1 // pred_region
      %s23 = ssub.s32 2688, 2688
      %24 = vsyncadd [#allocation6], %s23
      %s25 = sshll.u32 [#allocation5], 4
      %s26 = int_to_ptr.vmem [resolvable:$true] %s25
      %31 = dma.hbm_to_vmem [thread:$0]  %s1, 2688, %s26, [#allocation6], 128, 128, 8
    $region9: #{_cond_linear_packed.1} parent=1 // pred_fallthru
      _
    // Predicated region
    $region10: #{_cond_linear_packed.1} parent=1 // pred_check
      _
    $region11: #{_cond_linear_packed.1} parent=1 // pred_check_branch
      %33 = sbr.rel (0) target = $region13
    $region12: #{_cond_linear_packed.1} parent=1 // pred_region
      %34 = dma.done [#allocation3], 32
    $region13: #{_cond_linear_packed.1} parent=1 // pred_fallthru
      _
    // Predicated region
    $region14: #{_cond_linear_packed.1} parent=1 // pred_check
      _
    $region15: #{_cond_linear_packed.1} parent=1 // pred_check_branch
      %36 = sbr.rel (0) target = $region17
    $region16: #{_cond_linear_packed.1} parent=1 // pred_region
      %37 = dma.done [#allocation6], 2688
    $region17: #{_cond_linear_packed.1} parent=1 // pred_fallthru
      _
    %v38 = vld [vmem:[#allocation2] sm:$0x3]
    %v39 = vld [vmem:[#allocation5] sm:$0xff]
    %v40 = vld [vmem:[#allocation5 + $0x8] sm:$0xff]
    %v41 = vld [vmem:[#allocation5 + $0x10] sm:$0xff]
    %v42 = vld [vmem:[#allocation5 + $0x18] sm:$0xff]
    %v43 = vld [vmem:[#allocation5 + $0x20] sm:$0xff]
    %v44 = vld [vmem:[#allocation5 + $0x28] sm:$0xff]
    %v45 = vld [vmem:[#allocation5 + $0x30] sm:$0xff]
    %v46 = vld [vmem:[#allocation5 + $0x38] sm:$0xff]
    %v47 = vld [vmem:[#allocation5 + $0x40] sm:$0xff]
    %v48 = vld [vmem:[#allocation5 + $0x48] sm:$0xff]
    %v49 = vld [vmem:[#allocation5 + $0x50] sm:$0xff]
    %v50 = vld [vmem:[#allocation5 + $0x58] sm:$0xff]
    %v51 = vld [vmem:[#allocation5 + $0x60] sm:$0xff]
    %v52 = vld [vmem:[#allocation5 + $0x68] sm:$0xff]
    %v53 = vld [vmem:[#allocation5 + $0x70] sm:$0xff]
    %v54 = vld [vmem:[#allocation5 + $0x78] sm:$0xff]
    %v55 = vld [vmem:[#allocation5 + $0x80] sm:$0xff]
    %v56 = vld [vmem:[#allocation5 + $0x88] sm:$0xff]
    %v57 = vld [vmem:[#allocation5 + $0x90] sm:$0xff]
    %v58 = vld [vmem:[#allocation5 + $0x98] sm:$0xff]
    %v59 = vld [vmem:[#allocation5 + $0xa0] sm:$0xff]
    %61 = vrot.lane.b32.xlu0 %v38, 120
    %v62 = vpop.permute.xlu0 %61
    %vm63 = vcmask 130048
    %v64 = vsel %vm63, %v62, 0
    %66 = vmatprep.subr.mxu0 0.0
    %67 = vmatpush1.msra.mxu0 0.0
    %68 = vmatprep.subr.mxu0 0.0
    %69 = vmatpush1.msra.mxu0 0.0
    %70 = vmatprep.subr.mxu0 0.0
    %71 = vmatpush1.msra.mxu0 0.0
    %72 = vmatprep.subr.mxu0 0.0
    %73 = vmatpush1.msra.mxu0 0.0
    %74 = vmatprep.subr.mxu0 0.0
    %75 = vmatpush1.msra.mxu0 0.0
    %76 = vmatprep.subr.mxu0 0.0
    %77 = vmatpush1.msra.mxu0 0.0
    %78 = vmatprep.subr.mxu0 0.0
    %79 = vmatpush1.msra.mxu0 0.0
    %80 = vmatprep.subr.mxu0 0.0
    %81 = vmatpush1.msra.mxu0 0.0
    %82 = vmatprep.subr.mxu0 0.0
    %83 = vmatpush1.msra.mxu0 0.0
    %84 = vmatprep.subr.mxu0 0.0
    %85 = vmatpush1.msra.mxu0 0.0
    %86 = vmatprep.subr.mxu0 0.0
    %87 = vmatpush1.msra.mxu0 0.0
    %88 = vmatprep.subr.mxu0 0.0
    %89 = vmatpush1.msra.mxu0 0.0
    %90 = vmatprep.subr.mxu0 0.0
    %91 = vmatpush1.msra.mxu0 0.0
    %92 = vmatprep.subr.mxu0 0.0
    %93 = vmatpush1.msra.mxu0 0.0
    %94 = vmatprep.subr.mxu0 0.0
    %v95 = vand.u32 %v40, 4294901760
    %96 = vmatpush1.msra.mxu0 %v95
    %97 = vmatprep.subr.mxu0 0.0
    %v98 = vand.u32 %v39, 4294901760
    %99 = vmatpush1.msra.mxu0 %v98
    %100 = vmatprep.subr.mxu0 0.0
    %101 = vmatpush2.msra.mxu0 0.0
    %102 = vmatprep.subr.mxu0 0.0
    %103 = vmatpush2.msra.mxu0 0.0
    %104 = vmatprep.subr.mxu0 0.0
    %105 = vmatpush2.msra.mxu0 0.0
    %106 = vmatprep.subr.mxu0 0.0
    %107 = vmatpush2.msra.mxu0 0.0
    %108 = vmatprep.subr.mxu0 0.0
    %109 = vmatpush2.msra.mxu0 0.0
    %110 = vmatprep.subr.mxu0 0.0
    %111 = vmatpush2.msra.mxu0 0.0
    %112 = vmatprep.subr.mxu0 0.0
    %113 = vmatpush2.msra.mxu0 0.0
    %114 = vmatprep.subr.mxu0 0.0
    %115 = vmatpush2.msra.mxu0 0.0
    %116 = vmatprep.subr.mxu0 0.0
    %117 = vmatpush2.msra.mxu0 0.0
    %118 = vmatprep.subr.mxu0 0.0
    %119 = vmatpush2.msra.mxu0 0.0
    %120 = vmatprep.subr.mxu0 0.0
    %121 = vmatpush2.msra.mxu0 0.0
    %122 = vmatprep.subr.mxu0 0.0
    %123 = vmatpush2.msra.mxu0 0.0
    %124 = vmatprep.subr.mxu0 0.0
    %125 = vmatpush2.msra.mxu0 0.0
    %126 = vmatprep.subr.mxu0 0.0
    %127 = vmatpush2.msra.mxu0 0.0
    %128 = vmatprep.subr.mxu0 0.0
    %129 = vmatpush2.msra.mxu0 0.0
    %130 = vmatprep.subr.mxu0 0.0
    %131 = vmatpush2.msra.mxu0 0.0
    %132 = vmatprep.mubr.f32.mxu0 0.0
    %v133 = vand.u32 %v64, 4294901760
    %v134 = vsub.f32 %v64, %v133
    %v135 = vand.u32 %v134, 4294901760
    %v136 = vsub.f32 %v134, %v135
    %v137 = vand.u32 %v136, 4294901760
    %138 = vmatmul.mubr.f32.gmra.mxu0 %v137
    %v139 = vpop.f32.mrf.mxu0
    %v140 = vadd.f32 0.0, %v139
    %v141 = vpop.f32.mrf.mxu0
    %142 = vdwg.mxu0
    %143 = vmatprep.subr.mxu0 0.0
    %144 = vmatpush1.msra.mxu0 0.0
    %145 = vmatprep.subr.mxu0 0.0
    %146 = vmatpush1.msra.mxu0 0.0
    %147 = vmatprep.subr.mxu0 0.0
    %148 = vmatpush1.msra.mxu0 0.0
    %149 = vmatprep.subr.mxu0 0.0
    %150 = vmatpush1.msra.mxu0 0.0
    %151 = vmatprep.subr.mxu0 0.0
    %152 = vmatpush1.msra.mxu0 0.0
    %153 = vmatprep.subr.mxu0 0.0
    %154 = vmatpush1.msra.mxu0 0.0
    %155 = vmatprep.subr.mxu0 0.0
    %156 = vmatpush1.msra.mxu0 0.0
    %157 = vmatprep.subr.mxu0 0.0
    %158 = vmatpush1.msra.mxu0 0.0
    %159 = vmatprep.subr.mxu0 0.0
    %160 = vmatpush1.msra.mxu0 0.0
    %161 = vmatprep.subr.mxu0 0.0
    %162 = vmatpush1.msra.mxu0 0.0
    %163 = vmatprep.subr.mxu0 0.0
    %164 = vmatpush1.msra.mxu0 0.0
    %165 = vmatprep.subr.mxu0 0.0
    %166 = vmatpush1.msra.mxu0 0.0
    %167 = vmatprep.subr.mxu0 0.0
    %168 = vmatpush1.msra.mxu0 0.0
    %169 = vmatprep.subr.mxu0 0.0
    %170 = vmatpush1.msra.mxu0 0.0
    %171 = vmatprep.subr.mxu0 0.0
    %v172 = vand.u32 %v40, 4294901760
    %v173 = vsub.f32 %v40, %v172
    %v174 = vand.u32 %v173, 4294901760
    %v175 = vsub.f32 %v173, %v174
    %v176 = vand.u32 %v175, 4294901760
    %177 = vmatpush1.msra.mxu0 %v176
    %178 = vmatprep.subr.mxu0 0.0
    %v179 = vand.u32 %v39, 4294901760
    %v180 = vsub.f32 %v39, %v179
    %v181 = vand.u32 %v180, 4294901760
    %v182 = vsub.f32 %v180, %v181
    %v183 = vand.u32 %v182, 4294901760
    %184 = vmatpush1.msra.mxu0 %v183
    %185 = vmatprep.subr.mxu0 0.0
    %186 = vmatpush2.msra.mxu0 0.0
    %187 = vmatprep.subr.mxu0 0.0
    %188 = vmatpush2.msra.mxu0 0.0
    %189 = vmatprep.subr.mxu0 0.0
    %190 = vmatpush2.msra.mxu0 0.0
    %191 = vmatprep.subr.mxu0 0.0
    %192 = vmatpush2.msra.mxu0 0.0
    %193 = vmatprep.subr.mxu0 0.0
    %194 = vmatpush2.msra.mxu0 0.0
    %195 = vmatprep.subr.mxu0 0.0
    %196 = vmatpush2.msra.mxu0 0.0
    %197 = vmatprep.subr.mxu0 0.0
    %198 = vmatpush2.msra.mxu0 0.0
    %199 = vmatprep.subr.mxu0 0.0
    %200 = vmatpush2.msra.mxu0 0.0
    %201 = vmatprep.subr.mxu0 0.0
    %202 = vmatpush2.msra.mxu0 0.0
    %203 = vmatprep.subr.mxu0 0.0
    %204 = vmatpush2.msra.mxu0 0.0
    %205 = vmatprep.subr.mxu0 0.0
    %206 = vmatpush2.msra.mxu0 0.0
    %207 = vmatprep.subr.mxu0 0.0
    %208 = vmatpush2.msra.mxu0 0.0
    %209 = vmatprep.subr.mxu0 0.0
    %210 = vmatpush2.msra.mxu0 0.0
    %211 = vmatprep.subr.mxu0 0.0
    %212 = vmatpush2.msra.mxu0 0.0
    %213 = vmatprep.subr.mxu0 0.0
    %214 = vmatpush2.msra.mxu0 0.0
    %215 = vmatprep.subr.mxu0 0.0
    %216 = vmatpush2.msra.mxu0 0.0
    %217 = vmatprep.mubr.f32.mxu0 0.0
    %v218 = vand.u32 %v64, 4294901760
    %219 = vmatmul.mubr.f32.gmra.mxu0 %v218
    %v220 = vpop.f32.mrf.mxu0
    %v221 = vadd.f32 %v140, %v220
    %v222 = vpop.f32.mrf.mxu0
    %223 = vdwg.mxu0
    %224 = vmatprep.subr.mxu0 0.0
    %225 = vmatpush1.msra.mxu0 0.0
    %226 = vmatprep.subr.mxu0 0.0
    %227 = vmatpush1.msra.mxu0 0.0
    %228 = vmatprep.subr.mxu0 0.0
    %229 = vmatpush1.msra.mxu0 0.0
    %230 = vmatprep.subr.mxu0 0.0
    %231 = vmatpush1.msra.mxu0 0.0
    %232 = vmatprep.subr.mxu0 0.0
    %233 = vmatpush1.msra.mxu0 0.0
    %234 = vmatprep.subr.mxu0 0.0
    %235 = vmatpush1.msra.mxu0 0.0
    %236 = vmatprep.subr.mxu0 0.0
    %237 = vmatpush1.msra.mxu0 0.0
    %238 = vmatprep.subr.mxu0 0.0
    %239 = vmatpush1.msra.mxu0 0.0
    %240 = vmatprep.subr.mxu0 0.0
    %241 = vmatpush1.msra.mxu0 0.0
    %242 = vmatprep.subr.mxu0 0.0
    %243 = vmatpush1.msra.mxu0 0.0
    %244 = vmatprep.subr.mxu0 0.0
    %245 = vmatpush1.msra.mxu0 0.0
    %246 = vmatprep.subr.mxu0 0.0
    %247 = vmatpush1.msra.mxu0 0.0
    %248 = vmatprep.subr.mxu0 0.0
    %249 = vmatpush1.msra.mxu0 0.0
    %250 = vmatprep.subr.mxu0 0.0
    %251 = vmatpush1.msra.mxu0 0.0
    %252 = vmatprep.subr.mxu0 0.0
    %v253 = vand.u32 %v40, 4294901760
    %v254 = vsub.f32 %v40, %v253
    %255 = vmatpush1.msra.mxu0 %v254
    %256 = vmatprep.subr.mxu0 0.0
    %v257 = vand.u32 %v39, 4294901760
    %v258 = vsub.f32 %v39, %v257
    %259 = vmatpush1.msra.mxu0 %v258
    %260 = vmatprep.subr.mxu0 0.0
    %261 = vmatpush2.msra.mxu0 0.0
    %262 = vmatprep.subr.mxu0 0.0
    %263 = vmatpush2.msra.mxu0 0.0
    %264 = vmatprep.subr.mxu0 0.0
    %265 = vmatpush2.msra.mxu0 0.0
    %266 = vmatprep.subr.mxu0 0.0
    %267 = vmatpush2.msra.mxu0 0.0
    %268 = vmatprep.subr.mxu0 0.0
    %269 = vmatpush2.msra.mxu0 0.0
    %270 = vmatprep.subr.mxu0 0.0
    %271 = vmatpush2.msra.mxu0 0.0
    %272 = vmatprep.subr.mxu0 0.0
    %273 = vmatpush2.msra.mxu0 0.0
    %274 = vmatprep.subr.mxu0 0.0
    %275 = vmatpush2.msra.mxu0 0.0
    %276 = vmatprep.subr.mxu0 0.0
    %277 = vmatpush2.msra.mxu0 0.0
    %278 = vmatprep.subr.mxu0 0.0
    %279 = vmatpush2.msra.mxu0 0.0
    %280 = vmatprep.subr.mxu0 0.0
    %281 = vmatpush2.msra.mxu0 0.0
    %282 = vmatprep.subr.mxu0 0.0
    %283 = vmatpush2.msra.mxu0 0.0
    %284 = vmatprep.subr.mxu0 0.0
    %285 = vmatpush2.msra.mxu0 0.0
    %286 = vmatprep.subr.mxu0 0.0
    %287 = vmatpush2.msra.mxu0 0.0
    %288 = vmatprep.subr.mxu0 0.0
    %289 = vmatpush2.msra.mxu0 0.0
    %290 = vmatprep.subr.mxu0 0.0
    %291 = vmatpush2.msra.mxu0 0.0
    %292 = vmatprep.mubr.f32.mxu0 0.0
    %v293 = vand.u32 %v64, 4294901760
    %v294 = vsub.f32 %v64, %v293
    %295 = vmatmul.mubr.f32.gmra.mxu0 %v294
    %v296 = vpop.f32.mrf.mxu0
    %v297 = vadd.f32 %v221, %v296
    %v298 = vpop.f32.mrf.mxu0
    %299 = vdwg.mxu0
    %300 = vmatprep.subr.mxu0 0.0
    %301 = vmatpush1.msra.mxu0 0.0
    %302 = vmatprep.subr.mxu0 0.0
    %303 = vmatpush1.msra.mxu0 0.0
    %304 = vmatprep.subr.mxu0 0.0
    %305 = vmatpush1.msra.mxu0 0.0
    %306 = vmatprep.subr.mxu0 0.0
    %307 = vmatpush1.msra.mxu0 0.0
    %308 = vmatprep.subr.mxu0 0.0
    %309 = vmatpush1.msra.mxu0 0.0
    %310 = vmatprep.subr.mxu0 0.0
    %311 = vmatpush1.msra.mxu0 0.0
    %312 = vmatprep.subr.mxu0 0.0
    %313 = vmatpush1.msra.mxu0 0.0
    %314 = vmatprep.subr.mxu0 0.0
    %315 = vmatpush1.msra.mxu0 0.0
    %316 = vmatprep.subr.mxu0 0.0
    %317 = vmatpush1.msra.mxu0 0.0
    %318 = vmatprep.subr.mxu0 0.0
    %319 = vmatpush1.msra.mxu0 0.0
    %320 = vmatprep.subr.mxu0 0.0
    %321 = vmatpush1.msra.mxu0 0.0
    %322 = vmatprep.subr.mxu0 0.0
    %323 = vmatpush1.msra.mxu0 0.0
    %324 = vmatprep.subr.mxu0 0.0
    %325 = vmatpush1.msra.mxu0 0.0
    %326 = vmatprep.subr.mxu0 0.0
    %327 = vmatpush1.msra.mxu0 0.0
    %328 = vmatprep.subr.mxu0 0.0
    %v329 = vand.u32 %v40, 4294901760
    %330 = vmatpush1.msra.mxu0 %v329
    %331 = vmatprep.subr.mxu0 0.0
    %v332 = vand.u32 %v39, 4294901760
    %333 = vmatpush1.msra.mxu0 %v332
    %334 = vmatprep.subr.mxu0 0.0
    %335 = vmatpush2.msra.mxu0 0.0
    %336 = vmatprep.subr.mxu0 0.0
    %337 = vmatpush2.msra.mxu0 0.0
    %338 = vmatprep.subr.mxu0 0.0
    %339 = vmatpush2.msra.mxu0 0.0
    %340 = vmatprep.subr.mxu0 0.0
    %341 = vmatpush2.msra.mxu0 0.0
    %342 = vmatprep.subr.mxu0 0.0
    %343 = vmatpush2.msra.mxu0 0.0
    %344 = vmatprep.subr.mxu0 0.0
    %345 = vmatpush2.msra.mxu0 0.0
    %346 = vmatprep.subr.mxu0 0.0
    %347 = vmatpush2.msra.mxu0 0.0
    %348 = vmatprep.subr.mxu0 0.0
    %349 = vmatpush2.msra.mxu0 0.0
    %350 = vmatprep.subr.mxu0 0.0
    %351 = vmatpush2.msra.mxu0 0.0
    %352 = vmatprep.subr.mxu0 0.0
    %353 = vmatpush2.msra.mxu0 0.0
    %354 = vmatprep.subr.mxu0 0.0
    %355 = vmatpush2.msra.mxu0 0.0
    %356 = vmatprep.subr.mxu0 0.0
    %357 = vmatpush2.msra.mxu0 0.0
    %358 = vmatprep.subr.mxu0 0.0
    %359 = vmatpush2.msra.mxu0 0.0
    %360 = vmatprep.subr.mxu0 0.0
    %361 = vmatpush2.msra.mxu0 0.0
    %362 = vmatprep.subr.mxu0 0.0
    %363 = vmatpush2.msra.mxu0 0.0
    %364 = vmatprep.subr.mxu0 0.0
    %365 = vmatpush2.msra.mxu0 0.0
    %366 = vmatprep.mubr.f32.mxu0 0.0
    %v367 = vand.u32 %v64, 4294901760
    %v368 = vsub.f32 %v64, %v367
    %v369 = vand.u32 %v368, 4294901760
    %370 = vmatmul.mubr.f32.gmra.mxu0 %v369
    %v371 = vpop.f32.mrf.mxu0
    %v372 = vadd.f32 %v297, %v371
    %v373 = vpop.f32.mrf.mxu0
    %374 = vdwg.mxu0
    %375 = vmatprep.subr.mxu0 0.0
    %376 = vmatpush1.msra.mxu0 0.0
    %377 = vmatprep.subr.mxu0 0.0
    %378 = vmatpush1.msra.mxu0 0.0
    %379 = vmatprep.subr.mxu0 0.0
    %380 = vmatpush1.msra.mxu0 0.0
    %381 = vmatprep.subr.mxu0 0.0
    %382 = vmatpush1.msra.mxu0 0.0
    %383 = vmatprep.subr.mxu0 0.0
    %384 = vmatpush1.msra.mxu0 0.0
    %385 = vmatprep.subr.mxu0 0.0
    %386 = vmatpush1.msra.mxu0 0.0
    %387 = vmatprep.subr.mxu0 0.0
    %388 = vmatpush1.msra.mxu0 0.0
    %389 = vmatprep.subr.mxu0 0.0
    %390 = vmatpush1.msra.mxu0 0.0
    %391 = vmatprep.subr.mxu0 0.0
    %392 = vmatpush1.msra.mxu0 0.0
    %393 = vmatprep.subr.mxu0 0.0
    %394 = vmatpush1.msra.mxu0 0.0
    %395 = vmatprep.subr.mxu0 0.0
    %396 = vmatpush1.msra.mxu0 0.0
    %397 = vmatprep.subr.mxu0 0.0
    %398 = vmatpush1.msra.mxu0 0.0
    %399 = vmatprep.subr.mxu0 0.0
    %400 = vmatpush1.msra.mxu0 0.0
    %401 = vmatprep.subr.mxu0 0.0
    %402 = vmatpush1.msra.mxu0 0.0
    %403 = vmatprep.subr.mxu0 0.0
    %v404 = vand.u32 %v40, 4294901760
    %v405 = vsub.f32 %v40, %v404
    %v406 = vand.u32 %v405, 4294901760
    %407 = vmatpush1.msra.mxu0 %v406
    %408 = vmatprep.subr.mxu0 0.0
    %v409 = vand.u32 %v39, 4294901760
    %v410 = vsub.f32 %v39, %v409
    %v411 = vand.u32 %v410, 4294901760
    %412 = vmatpush1.msra.mxu0 %v411
    %413 = vmatprep.subr.mxu0 0.0
    %414 = vmatpush2.msra.mxu0 0.0
    %415 = vmatprep.subr.mxu0 0.0
    %416 = vmatpush2.msra.mxu0 0.0
    %417 = vmatprep.subr.mxu0 0.0
    %418 = vmatpush2.msra.mxu0 0.0
    %419 = vmatprep.subr.mxu0 0.0
    %420 = vmatpush2.msra.mxu0 0.0
    %421 = vmatprep.subr.mxu0 0.0
    %422 = vmatpush2.msra.mxu0 0.0
    %423 = vmatprep.subr.mxu0 0.0
    %424 = vmatpush2.msra.mxu0 0.0
    %425 = vmatprep.subr.mxu0 0.0
    %426 = vmatpush2.msra.mxu0 0.0
    %427 = vmatprep.subr.mxu0 0.0
    %428 = vmatpush2.msra.mxu0 0.0
    %429 = vmatprep.subr.mxu0 0.0
    %430 = vmatpush2.msra.mxu0 0.0
    %431 = vmatprep.subr.mxu0 0.0
    %432 = vmatpush2.msra.mxu0 0.0
    %433 = vmatprep.subr.mxu0 0.0
    %434 = vmatpush2.msra.mxu0 0.0
    %435 = vmatprep.subr.mxu0 0.0
    %436 = vmatpush2.msra.mxu0 0.0
    %437 = vmatprep.subr.mxu0 0.0
    %438 = vmatpush2.msra.mxu0 0.0
    %439 = vmatprep.subr.mxu0 0.0
    %440 = vmatpush2.msra.mxu0 0.0
    %441 = vmatprep.subr.mxu0 0.0
    %442 = vmatpush2.msra.mxu0 0.0
    %443 = vmatprep.subr.mxu0 0.0
    %444 = vmatpush2.msra.mxu0 0.0
    %445 = vmatprep.mubr.f32.mxu0 0.0
    %v446 = vand.u32 %v64, 4294901760
    %447 = vmatmul.mubr.f32.gmra.mxu0 %v446
    %v448 = vpop.f32.mrf.mxu0
    %v449 = vadd.f32 %v372, %v448
    %v450 = vpop.f32.mrf.mxu0
    %451 = vdwg.mxu0
    %452 = vmatprep.subr.mxu0 0.0
    %453 = vmatpush1.msra.mxu0 0.0
    %454 = vmatprep.subr.mxu0 0.0
    %455 = vmatpush1.msra.mxu0 0.0
    %456 = vmatprep.subr.mxu0 0.0
    %457 = vmatpush1.msra.mxu0 0.0
    %458 = vmatprep.subr.mxu0 0.0
    %459 = vmatpush1.msra.mxu0 0.0
    %460 = vmatprep.subr.mxu0 0.0
    %461 = vmatpush1.msra.mxu0 0.0
    %462 = vmatprep.subr.mxu0 0.0
    %463 = vmatpush1.msra.mxu0 0.0
    %464 = vmatprep.subr.mxu0 0.0
    %465 = vmatpush1.msra.mxu0 0.0
    %466 = vmatprep.subr.mxu0 0.0
    %467 = vmatpush1.msra.mxu0 0.0
    %468 = vmatprep.subr.mxu0 0.0
    %469 = vmatpush1.msra.mxu0 0.0
    %470 = vmatprep.subr.mxu0 0.0
    %471 = vmatpush1.msra.mxu0 0.0
    %472 = vmatprep.subr.mxu0 0.0
    %473 = vmatpush1.msra.mxu0 0.0
    %474 = vmatprep.subr.mxu0 0.0
    %475 = vmatpush1.msra.mxu0 0.0
    %476 = vmatprep.subr.mxu0 0.0
    %477 = vmatpush1.msra.mxu0 0.0
    %478 = vmatprep.subr.mxu0 0.0
    %479 = vmatpush1.msra.mxu0 0.0
    %480 = vmatprep.subr.mxu0 0.0
    %v481 = vand.u32 %v40, 4294901760
    %482 = vmatpush1.msra.mxu0 %v481
    %483 = vmatprep.subr.mxu0 0.0
    %v484 = vand.u32 %v39, 4294901760
    %485 = vmatpush1.msra.mxu0 %v484
    %486 = vmatprep.subr.mxu0 0.0
    %487 = vmatpush2.msra.mxu0 0.0
    %488 = vmatprep.subr.mxu0 0.0
    %489 = vmatpush2.msra.mxu0 0.0
    %490 = vmatprep.subr.mxu0 0.0
    %491 = vmatpush2.msra.mxu0 0.0
    %492 = vmatprep.subr.mxu0 0.0
    %493 = vmatpush2.msra.mxu0 0.0
    %494 = vmatprep.subr.mxu0 0.0
    %495 = vmatpush2.msra.mxu0 0.0
    %496 = vmatprep.subr.mxu0 0.0
    %497 = vmatpush2.msra.mxu0 0.0
    %498 = vmatprep.subr.mxu0 0.0
    %499 = vmatpush2.msra.mxu0 0.0
    %500 = vmatprep.subr.mxu0 0.0
    %501 = vmatpush2.msra.mxu0 0.0
    %502 = vmatprep.subr.mxu0 0.0
    %503 = vmatpush2.msra.mxu0 0.0
    %504 = vmatprep.subr.mxu0 0.0
    %505 = vmatpush2.msra.mxu0 0.0
    %506 = vmatprep.subr.mxu0 0.0
    %507 = vmatpush2.msra.mxu0 0.0
    %508 = vmatprep.subr.mxu0 0.0
    %509 = vmatpush2.msra.mxu0 0.0
    %510 = vmatprep.subr.mxu0 0.0
    %511 = vmatpush2.msra.mxu0 0.0
    %512 = vmatprep.subr.mxu0 0.0
    %513 = vmatpush2.msra.mxu0 0.0
    %514 = vmatprep.subr.mxu0 0.0
    %515 = vmatpush2.msra.mxu0 0.0
    %516 = vmatprep.subr.mxu0 0.0
    %517 = vmatpush2.msra.mxu0 0.0
    %518 = vmatprep.mubr.f32.mxu0 0.0
    %v519 = vand.u32 %v64, 4294901760
    %520 = vmatmul.mubr.f32.gmra.mxu0 %v519
    %v521 = vpop.f32.mrf.mxu0
    %v522 = vadd.f32 %v449, %v521
    %v523 = vpop.f32.mrf.mxu0
    %524 = vdwg.mxu0
    %vm525 = vcmask 64512
    %v526 = vsel %vm525, %v38, 0
    %528 = vmatprep.subr.mxu0 0.0
    %529 = vmatpush1.msra.mxu0 0.0
    %530 = vmatprep.subr.mxu0 0.0
    %531 = vmatpush1.msra.mxu0 0.0
    %532 = vmatprep.subr.mxu0 0.0
    %533 = vmatpush1.msra.mxu0 0.0
    %534 = vmatprep.subr.mxu0 0.0
    %535 = vmatpush1.msra.mxu0 0.0
    %536 = vmatprep.subr.mxu0 0.0
    %537 = vmatpush1.msra.mxu0 0.0
    %538 = vmatprep.subr.mxu0 0.0
    %539 = vmatpush1.msra.mxu0 0.0
    %540 = vmatprep.subr.mxu0 0.0
    %541 = vmatpush1.msra.mxu0 0.0
    %542 = vmatprep.subr.mxu0 0.0
    %543 = vmatpush1.msra.mxu0 0.0
    %544 = vmatprep.subr.mxu0 0.0
    %545 = vmatpush1.msra.mxu0 0.0
    %546 = vmatprep.subr.mxu0 0.0
    %547 = vmatpush1.msra.mxu0 0.0
    %548 = vmatprep.subr.mxu0 0.0
    %549 = vmatpush1.msra.mxu0 0.0
    %550 = vmatprep.subr.mxu0 0.0
    %551 = vmatpush1.msra.mxu0 0.0
    %552 = vmatprep.subr.mxu0 0.0
    %553 = vmatpush1.msra.mxu0 0.0
    %554 = vmatprep.subr.mxu0 0.0
    %555 = vmatpush1.msra.mxu0 0.0
    %556 = vmatprep.subr.mxu0 0.0
    %557 = vmatpush1.msra.mxu0 0.0
    %558 = vmatprep.subr.mxu0 0.0
    %v559 = vand.u32 %v41, 4294901760
    %560 = vmatpush1.msra.mxu0 %v559
    %561 = vmatprep.subr.mxu0 0.0
    %562 = vmatpush2.msra.mxu0 0.0
    %563 = vmatprep.subr.mxu0 0.0
    %564 = vmatpush2.msra.mxu0 0.0
    %565 = vmatprep.subr.mxu0 0.0
    %566 = vmatpush2.msra.mxu0 0.0
    %567 = vmatprep.subr.mxu0 0.0
    %568 = vmatpush2.msra.mxu0 0.0
    %569 = vmatprep.subr.mxu0 0.0
    %570 = vmatpush2.msra.mxu0 0.0
    %571 = vmatprep.subr.mxu0 0.0
    %572 = vmatpush2.msra.mxu0 0.0
    %573 = vmatprep.subr.mxu0 0.0
    %574 = vmatpush2.msra.mxu0 0.0
    %575 = vmatprep.subr.mxu0 0.0
    %576 = vmatpush2.msra.mxu0 0.0
    %577 = vmatprep.subr.mxu0 0.0
    %578 = vmatpush2.msra.mxu0 0.0
    %579 = vmatprep.subr.mxu0 0.0
    %580 = vmatpush2.msra.mxu0 0.0
    %581 = vmatprep.subr.mxu0 0.0
    %582 = vmatpush2.msra.mxu0 0.0
    %583 = vmatprep.subr.mxu0 0.0
    %584 = vmatpush2.msra.mxu0 0.0
    %585 = vmatprep.subr.mxu0 0.0
    %586 = vmatpush2.msra.mxu0 0.0
    %587 = vmatprep.subr.mxu0 0.0
    %588 = vmatpush2.msra.mxu0 0.0
    %589 = vmatprep.subr.mxu0 0.0
    %590 = vmatpush2.msra.mxu0 0.0
    %591 = vmatprep.subr.mxu0 0.0
    %592 = vmatpush2.msra.mxu0 0.0
    %593 = vmatprep.mubr.f32.mxu0 0.0
    %v594 = vand.u32 %v526, 4294901760
    %v595 = vsub.f32 %v526, %v594
    %v596 = vand.u32 %v595, 4294901760
    %v597 = vsub.f32 %v595, %v596
    %v598 = vand.u32 %v597, 4294901760
    %599 = vmatmul.mubr.f32.gmra.mxu0 %v598
    %v600 = vpop.f32.mrf.mxu0
    %v601 = vadd.f32 0.0, %v600
    %v602 = vpop.f32.mrf.mxu0
    %603 = vdwg.mxu0
    %604 = vmatprep.subr.mxu0 0.0
    %605 = vmatpush1.msra.mxu0 0.0
    %606 = vmatprep.subr.mxu0 0.0
    %607 = vmatpush1.msra.mxu0 0.0
    %608 = vmatprep.subr.mxu0 0.0
    %609 = vmatpush1.msra.mxu0 0.0
    %610 = vmatprep.subr.mxu0 0.0
    %611 = vmatpush1.msra.mxu0 0.0
    %612 = vmatprep.subr.mxu0 0.0
    %613 = vmatpush1.msra.mxu0 0.0
    %614 = vmatprep.subr.mxu0 0.0
    %615 = vmatpush1.msra.mxu0 0.0
    %616 = vmatprep.subr.mxu0 0.0
    %617 = vmatpush1.msra.mxu0 0.0
    %618 = vmatprep.subr.mxu0 0.0
    %619 = vmatpush1.msra.mxu0 0.0
    %620 = vmatprep.subr.mxu0 0.0
    %621 = vmatpush1.msra.mxu0 0.0
    %622 = vmatprep.subr.mxu0 0.0
    %623 = vmatpush1.msra.mxu0 0.0
    %624 = vmatprep.subr.mxu0 0.0
    %625 = vmatpush1.msra.mxu0 0.0
    %626 = vmatprep.subr.mxu0 0.0
    %627 = vmatpush1.msra.mxu0 0.0
    %628 = vmatprep.subr.mxu0 0.0
    %629 = vmatpush1.msra.mxu0 0.0
    %630 = vmatprep.subr.mxu0 0.0
    %631 = vmatpush1.msra.mxu0 0.0
    %632 = vmatprep.subr.mxu0 0.0
    %633 = vmatpush1.msra.mxu0 0.0
    %634 = vmatprep.subr.mxu0 0.0
    %v635 = vand.u32 %v41, 4294901760
    %v636 = vsub.f32 %v41, %v635
    %v637 = vand.u32 %v636, 4294901760
    %v638 = vsub.f32 %v636, %v637
    %v639 = vand.u32 %v638, 4294901760
    %640 = vmatpush1.msra.mxu0 %v639
    %641 = vmatprep.subr.mxu0 0.0
    %642 = vmatpush2.msra.mxu0 0.0
    %643 = vmatprep.subr.mxu0 0.0
    %644 = vmatpush2.msra.mxu0 0.0
    %645 = vmatprep.subr.mxu0 0.0
    %646 = vmatpush2.msra.mxu0 0.0
    %647 = vmatprep.subr.mxu0 0.0
    %648 = vmatpush2.msra.mxu0 0.0
    %649 = vmatprep.subr.mxu0 0.0
    %650 = vmatpush2.msra.mxu0 0.0
    %651 = vmatprep.subr.mxu0 0.0
    %652 = vmatpush2.msra.mxu0 0.0
    %653 = vmatprep.subr.mxu0 0.0
    %654 = vmatpush2.msra.mxu0 0.0
    %655 = vmatprep.subr.mxu0 0.0
    %656 = vmatpush2.msra.mxu0 0.0
    %657 = vmatprep.subr.mxu0 0.0
    %658 = vmatpush2.msra.mxu0 0.0
    %659 = vmatprep.subr.mxu0 0.0
    %660 = vmatpush2.msra.mxu0 0.0
    %661 = vmatprep.subr.mxu0 0.0
    %662 = vmatpush2.msra.mxu0 0.0
    %663 = vmatprep.subr.mxu0 0.0
    %664 = vmatpush2.msra.mxu0 0.0
    %665 = vmatprep.subr.mxu0 0.0
    %666 = vmatpush2.msra.mxu0 0.0
    %667 = vmatprep.subr.mxu0 0.0
    %668 = vmatpush2.msra.mxu0 0.0
    %669 = vmatprep.subr.mxu0 0.0
    %670 = vmatpush2.msra.mxu0 0.0
    %671 = vmatprep.subr.mxu0 0.0
    %672 = vmatpush2.msra.mxu0 0.0
    %673 = vmatprep.mubr.f32.mxu0 0.0
    %v674 = vand.u32 %v526, 4294901760
    %675 = vmatmul.mubr.f32.gmra.mxu0 %v674
    %v676 = vpop.f32.mrf.mxu0
    %v677 = vadd.f32 %v601, %v676
    %v678 = vpop.f32.mrf.mxu0
    %679 = vdwg.mxu0
    %680 = vmatprep.subr.mxu0 0.0
    %681 = vmatpush1.msra.mxu0 0.0
    %682 = vmatprep.subr.mxu0 0.0
    %683 = vmatpush1.msra.mxu0 0.0
    %684 = vmatprep.subr.mxu0 0.0
    %685 = vmatpush1.msra.mxu0 0.0
    %686 = vmatprep.subr.mxu0 0.0
    %687 = vmatpush1.msra.mxu0 0.0
    %688 = vmatprep.subr.mxu0 0.0
    %689 = vmatpush1.msra.mxu0 0.0
    %690 = vmatprep.subr.mxu0 0.0
    %691 = vmatpush1.msra.mxu0 0.0
    %692 = vmatprep.subr.mxu0 0.0
    %693 = vmatpush1.msra.mxu0 0.0
    %694 = vmatprep.subr.mxu0 0.0
    %695 = vmatpush1.msra.mxu0 0.0
    %696 = vmatprep.subr.mxu0 0.0
    %697 = vmatpush1.msra.mxu0 0.0
    %698 = vmatprep.subr.mxu0 0.0
    %699 = vmatpush1.msra.mxu0 0.0
    %700 = vmatprep.subr.mxu0 0.0
    %701 = vmatpush1.msra.mxu0 0.0
    %702 = vmatprep.subr.mxu0 0.0
    %703 = vmatpush1.msra.mxu0 0.0
    %704 = vmatprep.subr.mxu0 0.0
    %705 = vmatpush1.msra.mxu0 0.0
    %706 = vmatprep.subr.mxu0 0.0
    %707 = vmatpush1.msra.mxu0 0.0
    %708 = vmatprep.subr.mxu0 0.0
    %709 = vmatpush1.msra.mxu0 0.0
    %710 = vmatprep.subr.mxu0 0.0
    %v711 = vand.u32 %v41, 4294901760
    %v712 = vsub.f32 %v41, %v711
    %713 = vmatpush1.msra.mxu0 %v712
    %714 = vmatprep.subr.mxu0 0.0
    %715 = vmatpush2.msra.mxu0 0.0
    %716 = vmatprep.subr.mxu0 0.0
    %717 = vmatpush2.msra.mxu0 0.0
    %718 = vmatprep.subr.mxu0 0.0
    %719 = vmatpush2.msra.mxu0 0.0
    %720 = vmatprep.subr.mxu0 0.0
    %721 = vmatpush2.msra.mxu0 0.0
    %722 = vmatprep.subr.mxu0 0.0
    %723 = vmatpush2.msra.mxu0 0.0
    %724 = vmatprep.subr.mxu0 0.0
    %725 = vmatpush2.msra.mxu0 0.0
    %726 = vmatprep.subr.mxu0 0.0
    %727 = vmatpush2.msra.mxu0 0.0
    %728 = vmatprep.subr.mxu0 0.0
    %729 = vmatpush2.msra.mxu0 0.0
    %730 = vmatprep.subr.mxu0 0.0
    %731 = vmatpush2.msra.mxu0 0.0
    %732 = vmatprep.subr.mxu0 0.0
    %733 = vmatpush2.msra.mxu0 0.0
    %734 = vmatprep.subr.mxu0 0.0
    %735 = vmatpush2.msra.mxu0 0.0
    %736 = vmatprep.subr.mxu0 0.0
    %737 = vmatpush2.msra.mxu0 0.0
    %738 = vmatprep.subr.mxu0 0.0
    %739 = vmatpush2.msra.mxu0 0.0
    %740 = vmatprep.subr.mxu0 0.0
    %741 = vmatpush2.msra.mxu0 0.0
    %742 = vmatprep.subr.mxu0 0.0
    %743 = vmatpush2.msra.mxu0 0.0
    %744 = vmatprep.subr.mxu0 0.0
    %745 = vmatpush2.msra.mxu0 0.0
    %746 = vmatprep.mubr.f32.mxu0 0.0
    %v747 = vand.u32 %v526, 4294901760
    %v748 = vsub.f32 %v526, %v747
    %749 = vmatmul.mubr.f32.gmra.mxu0 %v748
    %v750 = vpop.f32.mrf.mxu0
    %v751 = vadd.f32 %v677, %v750
    %v752 = vpop.f32.mrf.mxu0
    %753 = vdwg.mxu0
    %754 = vmatprep.subr.mxu0 0.0
    %755 = vmatpush1.msra.mxu0 0.0
    %756 = vmatprep.subr.mxu0 0.0
    %757 = vmatpush1.msra.mxu0 0.0
    %758 = vmatprep.subr.mxu0 0.0
    %759 = vmatpush1.msra.mxu0 0.0
    %760 = vmatprep.subr.mxu0 0.0
    %761 = vmatpush1.msra.mxu0 0.0
    %762 = vmatprep.subr.mxu0 0.0
    %763 = vmatpush1.msra.mxu0 0.0
    %764 = vmatprep.subr.mxu0 0.0
    %765 = vmatpush1.msra.mxu0 0.0
    %766 = vmatprep.subr.mxu0 0.0
    %767 = vmatpush1.msra.mxu0 0.0
    %768 = vmatprep.subr.mxu0 0.0
    %769 = vmatpush1.msra.mxu0 0.0
    %770 = vmatprep.subr.mxu0 0.0
    %771 = vmatpush1.msra.mxu0 0.0
    %772 = vmatprep.subr.mxu0 0.0
    %773 = vmatpush1.msra.mxu0 0.0
    %774 = vmatprep.subr.mxu0 0.0
    %775 = vmatpush1.msra.mxu0 0.0
    %776 = vmatprep.subr.mxu0 0.0
    %777 = vmatpush1.msra.mxu0 0.0
    %778 = vmatprep.subr.mxu0 0.0
    %779 = vmatpush1.msra.mxu0 0.0
    %780 = vmatprep.subr.mxu0 0.0
    %781 = vmatpush1.msra.mxu0 0.0
    %782 = vmatprep.subr.mxu0 0.0
    %783 = vmatpush1.msra.mxu0 0.0
    %784 = vmatprep.subr.mxu0 0.0
    %v785 = vand.u32 %v41, 4294901760
    %786 = vmatpush1.msra.mxu0 %v785
    %787 = vmatprep.subr.mxu0 0.0
    %788 = vmatpush2.msra.mxu0 0.0
    %789 = vmatprep.subr.mxu0 0.0
    %790 = vmatpush2.msra.mxu0 0.0
    %791 = vmatprep.subr.mxu0 0.0
    %792 = vmatpush2.msra.mxu0 0.0
    %793 = vmatprep.subr.mxu0 0.0
    %794 = vmatpush2.msra.mxu0 0.0
    %795 = vmatprep.subr.mxu0 0.0
    %796 = vmatpush2.msra.mxu0 0.0
    %797 = vmatprep.subr.mxu0 0.0
    %798 = vmatpush2.msra.mxu0 0.0
    %799 = vmatprep.subr.mxu0 0.0
    %800 = vmatpush2.msra.mxu0 0.0
    %801 = vmatprep.subr.mxu0 0.0
    %802 = vmatpush2.msra.mxu0 0.0
    %803 = vmatprep.subr.mxu0 0.0
    %804 = vmatpush2.msra.mxu0 0.0
    %805 = vmatprep.subr.mxu0 0.0
    %806 = vmatpush2.msra.mxu0 0.0
    %807 = vmatprep.subr.mxu0 0.0
    %808 = vmatpush2.msra.mxu0 0.0
    %809 = vmatprep.subr.mxu0 0.0
    %810 = vmatpush2.msra.mxu0 0.0
    %811 = vmatprep.subr.mxu0 0.0
    %812 = vmatpush2.msra.mxu0 0.0
    %813 = vmatprep.subr.mxu0 0.0
    %814 = vmatpush2.msra.mxu0 0.0
    %815 = vmatprep.subr.mxu0 0.0
    %816 = vmatpush2.msra.mxu0 0.0
    %817 = vmatprep.subr.mxu0 0.0
    %818 = vmatpush2.msra.mxu0 0.0
    %819 = vmatprep.mubr.f32.mxu0 0.0
    %v820 = vand.u32 %v526, 4294901760
    %v821 = vsub.f32 %v526, %v820
    %v822 = vand.u32 %v821, 4294901760
    %823 = vmatmul.mubr.f32.gmra.mxu0 %v822
    %v824 = vpop.f32.mrf.mxu0
    %v825 = vadd.f32 %v751, %v824
    %v826 = vpop.f32.mrf.mxu0
    %827 = vdwg.mxu0
    %828 = vmatprep.subr.mxu0 0.0
    %829 = vmatpush1.msra.mxu0 0.0
    %830 = vmatprep.subr.mxu0 0.0
    %831 = vmatpush1.msra.mxu0 0.0
    %832 = vmatprep.subr.mxu0 0.0
    %833 = vmatpush1.msra.mxu0 0.0
    %834 = vmatprep.subr.mxu0 0.0
    %835 = vmatpush1.msra.mxu0 0.0
    %836 = vmatprep.subr.mxu0 0.0
    %837 = vmatpush1.msra.mxu0 0.0
    %838 = vmatprep.subr.mxu0 0.0
    %839 = vmatpush1.msra.mxu0 0.0
    %840 = vmatprep.subr.mxu0 0.0
    %841 = vmatpush1.msra.mxu0 0.0
    %842 = vmatprep.subr.mxu0 0.0
    %843 = vmatpush1.msra.mxu0 0.0
    %844 = vmatprep.subr.mxu0 0.0
    %845 = vmatpush1.msra.mxu0 0.0
    %846 = vmatprep.subr.mxu0 0.0
    %847 = vmatpush1.msra.mxu0 0.0
    %848 = vmatprep.subr.mxu0 0.0
    %849 = vmatpush1.msra.mxu0 0.0
    %850 = vmatprep.subr.mxu0 0.0
    %851 = vmatpush1.msra.mxu0 0.0
    %852 = vmatprep.subr.mxu0 0.0
    %853 = vmatpush1.msra.mxu0 0.0
    %854 = vmatprep.subr.mxu0 0.0
    %855 = vmatpush1.msra.mxu0 0.0
    %856 = vmatprep.subr.mxu0 0.0
    %857 = vmatpush1.msra.mxu0 0.0
    %858 = vmatprep.subr.mxu0 0.0
    %v859 = vand.u32 %v41, 4294901760
    %v860 = vsub.f32 %v41, %v859
    %v861 = vand.u32 %v860, 4294901760
    %862 = vmatpush1.msra.mxu0 %v861
    %863 = vmatprep.subr.mxu0 0.0
    %864 = vmatpush2.msra.mxu0 0.0
    %865 = vmatprep.subr.mxu0 0.0
    %866 = vmatpush2.msra.mxu0 0.0
    %867 = vmatprep.subr.mxu0 0.0
    %868 = vmatpush2.msra.mxu0 0.0
    %869 = vmatprep.subr.mxu0 0.0
    %870 = vmatpush2.msra.mxu0 0.0
    %871 = vmatprep.subr.mxu0 0.0
    %872 = vmatpush2.msra.mxu0 0.0
    %873 = vmatprep.subr.mxu0 0.0
    %874 = vmatpush2.msra.mxu0 0.0
    %875 = vmatprep.subr.mxu0 0.0
    %876 = vmatpush2.msra.mxu0 0.0
    %877 = vmatprep.subr.mxu0 0.0
    %878 = vmatpush2.msra.mxu0 0.0
    %879 = vmatprep.subr.mxu0 0.0
    %880 = vmatpush2.msra.mxu0 0.0
    %881 = vmatprep.subr.mxu0 0.0
    %882 = vmatpush2.msra.mxu0 0.0
    %883 = vmatprep.subr.mxu0 0.0
    %884 = vmatpush2.msra.mxu0 0.0
    %885 = vmatprep.subr.mxu0 0.0
    %886 = vmatpush2.msra.mxu0 0.0
    %887 = vmatprep.subr.mxu0 0.0
    %888 = vmatpush2.msra.mxu0 0.0
    %889 = vmatprep.subr.mxu0 0.0
    %890 = vmatpush2.msra.mxu0 0.0
    %891 = vmatprep.subr.mxu0 0.0
    %892 = vmatpush2.msra.mxu0 0.0
    %893 = vmatprep.subr.mxu0 0.0
    %894 = vmatpush2.msra.mxu0 0.0
    %895 = vmatprep.mubr.f32.mxu0 0.0
    %v896 = vand.u32 %v526, 4294901760
    %897 = vmatmul.mubr.f32.gmra.mxu0 %v896
    %v898 = vpop.f32.mrf.mxu0
    %v899 = vadd.f32 %v825, %v898
    %v900 = vpop.f32.mrf.mxu0
    %901 = vdwg.mxu0
    %902 = vmatprep.subr.mxu0 0.0
    %903 = vmatpush1.msra.mxu0 0.0
    %904 = vmatprep.subr.mxu0 0.0
    %905 = vmatpush1.msra.mxu0 0.0
    %906 = vmatprep.subr.mxu0 0.0
    %907 = vmatpush1.msra.mxu0 0.0
    %908 = vmatprep.subr.mxu0 0.0
    %909 = vmatpush1.msra.mxu0 0.0
    %910 = vmatprep.subr.mxu0 0.0
    %911 = vmatpush1.msra.mxu0 0.0
    %912 = vmatprep.subr.mxu0 0.0
    %913 = vmatpush1.msra.mxu0 0.0
    %914 = vmatprep.subr.mxu0 0.0
    %915 = vmatpush1.msra.mxu0 0.0
    %916 = vmatprep.subr.mxu0 0.0
    %917 = vmatpush1.msra.mxu0 0.0
    %918 = vmatprep.subr.mxu0 0.0
    %919 = vmatpush1.msra.mxu0 0.0
    %920 = vmatprep.subr.mxu0 0.0
    %921 = vmatpush1.msra.mxu0 0.0
    %922 = vmatprep.subr.mxu0 0.0
    %923 = vmatpush1.msra.mxu0 0.0
    %924 = vmatprep.subr.mxu0 0.0
    %925 = vmatpush1.msra.mxu0 0.0
    %926 = vmatprep.subr.mxu0 0.0
    %927 = vmatpush1.msra.mxu0 0.0
    %928 = vmatprep.subr.mxu0 0.0
    %929 = vmatpush1.msra.mxu0 0.0
    %930 = vmatprep.subr.mxu0 0.0
    %931 = vmatpush1.msra.mxu0 0.0
    %932 = vmatprep.subr.mxu0 0.0
    %v933 = vand.u32 %v41, 4294901760
    %934 = vmatpush1.msra.mxu0 %v933
    %935 = vmatprep.subr.mxu0 0.0
    %936 = vmatpush2.msra.mxu0 0.0
    %937 = vmatprep.subr.mxu0 0.0
    %938 = vmatpush2.msra.mxu0 0.0
    %939 = vmatprep.subr.mxu0 0.0
    %940 = vmatpush2.msra.mxu0 0.0
    %941 = vmatprep.subr.mxu0 0.0
    %942 = vmatpush2.msra.mxu0 0.0
    %943 = vmatprep.subr.mxu0 0.0
    %944 = vmatpush2.msra.mxu0 0.0
    %945 = vmatprep.subr.mxu0 0.0
    %946 = vmatpush2.msra.mxu0 0.0
    %947 = vmatprep.subr.mxu0 0.0
    %948 = vmatpush2.msra.mxu0 0.0
    %949 = vmatprep.subr.mxu0 0.0
    %950 = vmatpush2.msra.mxu0 0.0
    %951 = vmatprep.subr.mxu0 0.0
    %952 = vmatpush2.msra.mxu0 0.0
    %953 = vmatprep.subr.mxu0 0.0
    %954 = vmatpush2.msra.mxu0 0.0
    %955 = vmatprep.subr.mxu0 0.0
    %956 = vmatpush2.msra.mxu0 0.0
    %957 = vmatprep.subr.mxu0 0.0
    %958 = vmatpush2.msra.mxu0 0.0
    %959 = vmatprep.subr.mxu0 0.0
    %960 = vmatpush2.msra.mxu0 0.0
    %961 = vmatprep.subr.mxu0 0.0
    %962 = vmatpush2.msra.mxu0 0.0
    %963 = vmatprep.subr.mxu0 0.0
    %964 = vmatpush2.msra.mxu0 0.0
    %965 = vmatprep.subr.mxu0 0.0
    %966 = vmatpush2.msra.mxu0 0.0
    %967 = vmatprep.mubr.f32.mxu0 0.0
    %v968 = vand.u32 %v526, 4294901760
    %969 = vmatmul.mubr.f32.gmra.mxu0 %v968
    %v970 = vpop.f32.mrf.mxu0
    %v971 = vadd.f32 %v899, %v970
    %v972 = vpop.f32.mrf.mxu0
    %973 = vdwg.mxu0
    %v974 = vmul.f32 %v971, %v522
    %975 = vmatprep.subr.mxu0 0.0
    %v976 = vand.u32 %v57, 4294901760
    %977 = vmatpush1.msra.mxu0 %v976
    %978 = vmatprep.subr.mxu0 0.0
    %v979 = vand.u32 %v56, 4294901760
    %980 = vmatpush1.msra.mxu0 %v979
    %981 = vmatprep.subr.mxu0 0.0
    %v982 = vand.u32 %v55, 4294901760
    %983 = vmatpush1.msra.mxu0 %v982
    %984 = vmatprep.subr.mxu0 0.0
    %v985 = vand.u32 %v54, 4294901760
    %986 = vmatpush1.msra.mxu0 %v985
    %987 = vmatprep.subr.mxu0 0.0
    %v988 = vand.u32 %v53, 4294901760
    %989 = vmatpush1.msra.mxu0 %v988
    %990 = vmatprep.subr.mxu0 0.0
    %v991 = vand.u32 %v52, 4294901760
    %992 = vmatpush1.msra.mxu0 %v991
    %993 = vmatprep.subr.mxu0 0.0
    %v994 = vand.u32 %v51, 4294901760
    %995 = vmatpush1.msra.mxu0 %v994
    %996 = vmatprep.subr.mxu0 0.0
    %v997 = vand.u32 %v50, 4294901760
    %998 = vmatpush1.msra.mxu0 %v997
    %999 = vmatprep.subr.mxu0 0.0
    %v1000 = vand.u32 %v49, 4294901760
    %1001 = vmatpush1.msra.mxu0 %v1000
    %1002 = vmatprep.subr.mxu0 0.0
    %v1003 = vand.u32 %v48, 4294901760
    %1004 = vmatpush1.msra.mxu0 %v1003
    %1005 = vmatprep.subr.mxu0 0.0
    %v1006 = vand.u32 %v47, 4294901760
    %1007 = vmatpush1.msra.mxu0 %v1006
    %1008 = vmatprep.subr.mxu0 0.0
    %v1009 = vand.u32 %v46, 4294901760
    %1010 = vmatpush1.msra.mxu0 %v1009
    %1011 = vmatprep.subr.mxu0 0.0
    %v1012 = vand.u32 %v45, 4294901760
    %1013 = vmatpush1.msra.mxu0 %v1012
    %1014 = vmatprep.subr.mxu0 0.0
    %v1015 = vand.u32 %v44, 4294901760
    %1016 = vmatpush1.msra.mxu0 %v1015
    %1017 = vmatprep.subr.mxu0 0.0
    %v1018 = vand.u32 %v43, 4294901760
    %1019 = vmatpush1.msra.mxu0 %v1018
    %1020 = vmatprep.subr.mxu0 0.0
    %v1021 = vand.u32 %v42, 4294901760
    %1022 = vmatpush1.msra.mxu0 %v1021
    %1023 = vmatprep.subr.mxu0 0.0
    %1024 = vmatpush2.msra.mxu0 0.0
    %1025 = vmatprep.subr.mxu0 0.0
    %1026 = vmatpush2.msra.mxu0 0.0
    %1027 = vmatprep.subr.mxu0 0.0
    %1028 = vmatpush2.msra.mxu0 0.0
    %1029 = vmatprep.subr.mxu0 0.0
    %1030 = vmatpush2.msra.mxu0 0.0
    %1031 = vmatprep.subr.mxu0 0.0
    %1032 = vmatpush2.msra.mxu0 0.0
    %1033 = vmatprep.subr.mxu0 0.0
    %1034 = vmatpush2.msra.mxu0 0.0
    %1035 = vmatprep.subr.mxu0 0.0
    %1036 = vmatpush2.msra.mxu0 0.0
    %1037 = vmatprep.subr.mxu0 0.0
    %1038 = vmatpush2.msra.mxu0 0.0
    %1039 = vmatprep.subr.mxu0 0.0
    %1040 = vmatpush2.msra.mxu0 0.0
    %1041 = vmatprep.subr.mxu0 0.0
    %1042 = vmatpush2.msra.mxu0 0.0
    %1043 = vmatprep.subr.mxu0 0.0
    %1044 = vmatpush2.msra.mxu0 0.0
    %1045 = vmatprep.subr.mxu0 0.0
    %1046 = vmatpush2.msra.mxu0 0.0
    %1047 = vmatprep.subr.mxu0 0.0
    %1048 = vmatpush2.msra.mxu0 0.0
    %1049 = vmatprep.subr.mxu0 0.0
    %1050 = vmatpush2.msra.mxu0 0.0
    %1051 = vmatprep.subr.mxu0 0.0
    %v1052 = vand.u32 %v59, 4294901760
    %1053 = vmatpush2.msra.mxu0 %v1052
    %1054 = vmatprep.subr.mxu0 0.0
    %v1055 = vand.u32 %v58, 4294901760
    %1056 = vmatpush2.msra.mxu0 %v1055
    %v1057 = vand.u32 %v64, 4294901760
    %v1058 = vsub.f32 %v64, %v1057
    %v1059 = vand.u32 %v1058, 4294901760
    %v1060 = vsub.f32 %v1058, %v1059
    %v1061 = vand.u32 %v1060, 4294901760
    %1062 = vmatprep.mubr.f32.mxu0 %v1061
    %v1063 = vand.u32 %v974, 4294901760
    %v1064 = vsub.f32 %v974, %v1063
    %v1065 = vand.u32 %v1064, 4294901760
    %v1066 = vsub.f32 %v1064, %v1065
    %v1067 = vand.u32 %v1066, 4294901760
    %1068 = vmatmul.mubr.f32.gmra.mxu0 %v1067
    %v1069 = vpop.f32.mrf.mxu0
    %v1070 = vadd.f32 0.0, %v1069
    %v1071 = vpop.f32.mrf.mxu0
    %1072 = vdwg.mxu0
    %1073 = vmatprep.subr.mxu0 0.0
    %v1074 = vand.u32 %v57, 4294901760
    %v1075 = vsub.f32 %v57, %v1074
    %v1076 = vand.u32 %v1075, 4294901760
    %v1077 = vsub.f32 %v1075, %v1076
    %v1078 = vand.u32 %v1077, 4294901760
    %1079 = vmatpush1.msra.mxu0 %v1078
    %1080 = vmatprep.subr.mxu0 0.0
    %v1081 = vand.u32 %v56, 4294901760
    %v1082 = vsub.f32 %v56, %v1081
    %v1083 = vand.u32 %v1082, 4294901760
    %v1084 = vsub.f32 %v1082, %v1083
    %v1085 = vand.u32 %v1084, 4294901760
    %1086 = vmatpush1.msra.mxu0 %v1085
    %1087 = vmatprep.subr.mxu0 0.0
    %v1088 = vand.u32 %v55, 4294901760
    %v1089 = vsub.f32 %v55, %v1088
    %v1090 = vand.u32 %v1089, 4294901760
    %v1091 = vsub.f32 %v1089, %v1090
    %v1092 = vand.u32 %v1091, 4294901760
    %1093 = vmatpush1.msra.mxu0 %v1092
    %1094 = vmatprep.subr.mxu0 0.0
    %v1095 = vand.u32 %v54, 4294901760
    %v1096 = vsub.f32 %v54, %v1095
    %v1097 = vand.u32 %v1096, 4294901760
    %v1098 = vsub.f32 %v1096, %v1097
    %v1099 = vand.u32 %v1098, 4294901760
    %1100 = vmatpush1.msra.mxu0 %v1099
    %1101 = vmatprep.subr.mxu0 0.0
    %v1102 = vand.u32 %v53, 4294901760
    %v1103 = vsub.f32 %v53, %v1102
    %v1104 = vand.u32 %v1103, 4294901760
    %v1105 = vsub.f32 %v1103, %v1104
    %v1106 = vand.u32 %v1105, 4294901760
    %1107 = vmatpush1.msra.mxu0 %v1106
    %1108 = vmatprep.subr.mxu0 0.0
    %v1109 = vand.u32 %v52, 4294901760
    %v1110 = vsub.f32 %v52, %v1109
    %v1111 = vand.u32 %v1110, 4294901760
    %v1112 = vsub.f32 %v1110, %v1111
    %v1113 = vand.u32 %v1112, 4294901760
    %1114 = vmatpush1.msra.mxu0 %v1113
    %1115 = vmatprep.subr.mxu0 0.0
    %v1116 = vand.u32 %v51, 4294901760
    %v1117 = vsub.f32 %v51, %v1116
    %v1118 = vand.u32 %v1117, 4294901760
    %v1119 = vsub.f32 %v1117, %v1118
    %v1120 = vand.u32 %v1119, 4294901760
    %1121 = vmatpush1.msra.mxu0 %v1120
    %1122 = vmatprep.subr.mxu0 0.0
    %v1123 = vand.u32 %v50, 4294901760
    %v1124 = vsub.f32 %v50, %v1123
    %v1125 = vand.u32 %v1124, 4294901760
    %v1126 = vsub.f32 %v1124, %v1125
    %v1127 = vand.u32 %v1126, 4294901760
    %1128 = vmatpush1.msra.mxu0 %v1127
    %1129 = vmatprep.subr.mxu0 0.0
    %v1130 = vand.u32 %v49, 4294901760
    %v1131 = vsub.f32 %v49, %v1130
    %v1132 = vand.u32 %v1131, 4294901760
    %v1133 = vsub.f32 %v1131, %v1132
    %v1134 = vand.u32 %v1133, 4294901760
    %1135 = vmatpush1.msra.mxu0 %v1134
    %1136 = vmatprep.subr.mxu0 0.0
    %v1137 = vand.u32 %v48, 4294901760
    %v1138 = vsub.f32 %v48, %v1137
    %v1139 = vand.u32 %v1138, 4294901760
    %v1140 = vsub.f32 %v1138, %v1139
    %v1141 = vand.u32 %v1140, 4294901760
    %1142 = vmatpush1.msra.mxu0 %v1141
    %1143 = vmatprep.subr.mxu0 0.0
    %v1144 = vand.u32 %v47, 4294901760
    %v1145 = vsub.f32 %v47, %v1144
    %v1146 = vand.u32 %v1145, 4294901760
    %v1147 = vsub.f32 %v1145, %v1146
    %v1148 = vand.u32 %v1147, 4294901760
    %1149 = vmatpush1.msra.mxu0 %v1148
    %1150 = vmatprep.subr.mxu0 0.0
    %v1151 = vand.u32 %v46, 4294901760
    %v1152 = vsub.f32 %v46, %v1151
    %v1153 = vand.u32 %v1152, 4294901760
    %v1154 = vsub.f32 %v1152, %v1153
    %v1155 = vand.u32 %v1154, 4294901760
    %1156 = vmatpush1.msra.mxu0 %v1155
    %1157 = vmatprep.subr.mxu0 0.0
    %v1158 = vand.u32 %v45, 4294901760
    %v1159 = vsub.f32 %v45, %v1158
    %v1160 = vand.u32 %v1159, 4294901760
    %v1161 = vsub.f32 %v1159, %v1160
    %v1162 = vand.u32 %v1161, 4294901760
    %1163 = vmatpush1.msra.mxu0 %v1162
    %1164 = vmatprep.subr.mxu0 0.0
    %v1165 = vand.u32 %v44, 4294901760
    %v1166 = vsub.f32 %v44, %v1165
    %v1167 = vand.u32 %v1166, 4294901760
    %v1168 = vsub.f32 %v1166, %v1167
    %v1169 = vand.u32 %v1168, 4294901760
    %1170 = vmatpush1.msra.mxu0 %v1169
    %1171 = vmatprep.subr.mxu0 0.0
    %v1172 = vand.u32 %v43, 4294901760
    %v1173 = vsub.f32 %v43, %v1172
    %v1174 = vand.u32 %v1173, 4294901760
    %v1175 = vsub.f32 %v1173, %v1174
    %v1176 = vand.u32 %v1175, 4294901760
    %1177 = vmatpush1.msra.mxu0 %v1176
    %1178 = vmatprep.subr.mxu0 0.0
    %v1179 = vand.u32 %v42, 4294901760
    %v1180 = vsub.f32 %v42, %v1179
    %v1181 = vand.u32 %v1180, 4294901760
    %v1182 = vsub.f32 %v1180, %v1181
    %v1183 = vand.u32 %v1182, 4294901760
    %1184 = vmatpush1.msra.mxu0 %v1183
    %1185 = vmatprep.subr.mxu0 0.0
    %1186 = vmatpush2.msra.mxu0 0.0
    %1187 = vmatprep.subr.mxu0 0.0
    %1188 = vmatpush2.msra.mxu0 0.0
    %1189 = vmatprep.subr.mxu0 0.0
    %1190 = vmatpush2.msra.mxu0 0.0
    %1191 = vmatprep.subr.mxu0 0.0
    %1192 = vmatpush2.msra.mxu0 0.0
    %1193 = vmatprep.subr.mxu0 0.0
    %1194 = vmatpush2.msra.mxu0 0.0
    %1195 = vmatprep.subr.mxu0 0.0
    %1196 = vmatpush2.msra.mxu0 0.0
    %1197 = vmatprep.subr.mxu0 0.0
    %1198 = vmatpush2.msra.mxu0 0.0
    %1199 = vmatprep.subr.mxu0 0.0
    %1200 = vmatpush2.msra.mxu0 0.0
    %1201 = vmatprep.subr.mxu0 0.0
    %1202 = vmatpush2.msra.mxu0 0.0
    %1203 = vmatprep.subr.mxu0 0.0
    %1204 = vmatpush2.msra.mxu0 0.0
    %1205 = vmatprep.subr.mxu0 0.0
    %1206 = vmatpush2.msra.mxu0 0.0
    %1207 = vmatprep.subr.mxu0 0.0
    %1208 = vmatpush2.msra.mxu0 0.0
    %1209 = vmatprep.subr.mxu0 0.0
    %1210 = vmatpush2.msra.mxu0 0.0
    %1211 = vmatprep.subr.mxu0 0.0
    %1212 = vmatpush2.msra.mxu0 0.0
    %1213 = vmatprep.subr.mxu0 0.0
    %v1214 = vand.u32 %v59, 4294901760
    %v1215 = vsub.f32 %v59, %v1214
    %v1216 = vand.u32 %v1215, 4294901760
    %v1217 = vsub.f32 %v1215, %v1216
    %v1218 = vand.u32 %v1217, 4294901760
    %1219 = vmatpush2.msra.mxu0 %v1218
    %1220 = vmatprep.subr.mxu0 0.0
    %v1221 = vand.u32 %v58, 4294901760
    %v1222 = vsub.f32 %v58, %v1221
    %v1223 = vand.u32 %v1222, 4294901760
    %v1224 = vsub.f32 %v1222, %v1223
    %v1225 = vand.u32 %v1224, 4294901760
    %1226 = vmatpush2.msra.mxu0 %v1225
    %v1227 = vand.u32 %v64, 4294901760
    %1228 = vmatprep.mubr.f32.mxu0 %v1227
    %v1229 = vand.u32 %v974, 4294901760
    %1230 = vmatmul.mubr.f32.gmra.mxu0 %v1229
    %v1231 = vpop.f32.mrf.mxu0
    %v1232 = vadd.f32 %v1070, %v1231
    %v1233 = vpop.f32.mrf.mxu0
    %1234 = vdwg.mxu0
    %1235 = vmatprep.subr.mxu0 0.0
    %v1236 = vand.u32 %v57, 4294901760
    %v1237 = vsub.f32 %v57, %v1236
    %1238 = vmatpush1.msra.mxu0 %v1237
    %1239 = vmatprep.subr.mxu0 0.0
    %v1240 = vand.u32 %v56, 4294901760
    %v1241 = vsub.f32 %v56, %v1240
    %1242 = vmatpush1.msra.mxu0 %v1241
    %1243 = vmatprep.subr.mxu0 0.0
    %v1244 = vand.u32 %v55, 4294901760
    %v1245 = vsub.f32 %v55, %v1244
    %1246 = vmatpush1.msra.mxu0 %v1245
    %1247 = vmatprep.subr.mxu0 0.0
    %v1248 = vand.u32 %v54, 4294901760
    %v1249 = vsub.f32 %v54, %v1248
    %1250 = vmatpush1.msra.mxu0 %v1249
    %1251 = vmatprep.subr.mxu0 0.0
    %v1252 = vand.u32 %v53, 4294901760
    %v1253 = vsub.f32 %v53, %v1252
    %1254 = vmatpush1.msra.mxu0 %v1253
    %1255 = vmatprep.subr.mxu0 0.0
    %v1256 = vand.u32 %v52, 4294901760
    %v1257 = vsub.f32 %v52, %v1256
    %1258 = vmatpush1.msra.mxu0 %v1257
    %1259 = vmatprep.subr.mxu0 0.0
    %v1260 = vand.u32 %v51, 4294901760
    %v1261 = vsub.f32 %v51, %v1260
    %1262 = vmatpush1.msra.mxu0 %v1261
    %1263 = vmatprep.subr.mxu0 0.0
    %v1264 = vand.u32 %v50, 4294901760
    %v1265 = vsub.f32 %v50, %v1264
    %1266 = vmatpush1.msra.mxu0 %v1265
    %1267 = vmatprep.subr.mxu0 0.0
    %v1268 = vand.u32 %v49, 4294901760
    %v1269 = vsub.f32 %v49, %v1268
    %1270 = vmatpush1.msra.mxu0 %v1269
    %1271 = vmatprep.subr.mxu0 0.0
    %v1272 = vand.u32 %v48, 4294901760
    %v1273 = vsub.f32 %v48, %v1272
    %1274 = vmatpush1.msra.mxu0 %v1273
    %1275 = vmatprep.subr.mxu0 0.0
    %v1276 = vand.u32 %v47, 4294901760
    %v1277 = vsub.f32 %v47, %v1276
    %1278 = vmatpush1.msra.mxu0 %v1277
    %1279 = vmatprep.subr.mxu0 0.0
    %v1280 = vand.u32 %v46, 4294901760
    %v1281 = vsub.f32 %v46, %v1280
    %1282 = vmatpush1.msra.mxu0 %v1281
    %1283 = vmatprep.subr.mxu0 0.0
    %v1284 = vand.u32 %v45, 4294901760
    %v1285 = vsub.f32 %v45, %v1284
    %1286 = vmatpush1.msra.mxu0 %v1285
    %1287 = vmatprep.subr.mxu0 0.0
    %v1288 = vand.u32 %v44, 4294901760
    %v1289 = vsub.f32 %v44, %v1288
    %1290 = vmatpush1.msra.mxu0 %v1289
    %1291 = vmatprep.subr.mxu0 0.0
    %v1292 = vand.u32 %v43, 4294901760
    %v1293 = vsub.f32 %v43, %v1292
    %1294 = vmatpush1.msra.mxu0 %v1293
    %1295 = vmatprep.subr.mxu0 0.0
    %v1296 = vand.u32 %v42, 4294901760
    %v1297 = vsub.f32 %v42, %v1296
    %1298 = vmatpush1.msra.mxu0 %v1297
    %1299 = vmatprep.subr.mxu0 0.0
    %1300 = vmatpush2.msra.mxu0 0.0
    %1301 = vmatprep.subr.mxu0 0.0
    %1302 = vmatpush2.msra.mxu0 0.0
    %1303 = vmatprep.subr.mxu0 0.0
    %1304 = vmatpush2.msra.mxu0 0.0
    %1305 = vmatprep.subr.mxu0 0.0
    %1306 = vmatpush2.msra.mxu0 0.0
    %1307 = vmatprep.subr.mxu0 0.0
    %1308 = vmatpush2.msra.mxu0 0.0
    %1309 = vmatprep.subr.mxu0 0.0
    %1310 = vmatpush2.msra.mxu0 0.0
    %1311 = vmatprep.subr.mxu0 0.0
    %1312 = vmatpush2.msra.mxu0 0.0
    %1313 = vmatprep.subr.mxu0 0.0
    %1314 = vmatpush2.msra.mxu0 0.0
    %1315 = vmatprep.subr.mxu0 0.0
    %1316 = vmatpush2.msra.mxu0 0.0
    %1317 = vmatprep.subr.mxu0 0.0
    %1318 = vmatpush2.msra.mxu0 0.0
    %1319 = vmatprep.subr.mxu0 0.0
    %1320 = vmatpush2.msra.mxu0 0.0
    %1321 = vmatprep.subr.mxu0 0.0
    %1322 = vmatpush2.msra.mxu0 0.0
    %1323 = vmatprep.subr.mxu0 0.0
    %1324 = vmatpush2.msra.mxu0 0.0
    %1325 = vmatprep.subr.mxu0 0.0
    %1326 = vmatpush2.msra.mxu0 0.0
    %1327 = vmatprep.subr.mxu0 0.0
    %v1328 = vand.u32 %v59, 4294901760
    %v1329 = vsub.f32 %v59, %v1328
    %1330 = vmatpush2.msra.mxu0 %v1329
    %1331 = vmatprep.subr.mxu0 0.0
    %v1332 = vand.u32 %v58, 4294901760
    %v1333 = vsub.f32 %v58, %v1332
    %1334 = vmatpush2.msra.mxu0 %v1333
    %v1335 = vand.u32 %v64, 4294901760
    %v1336 = vsub.f32 %v64, %v1335
    %1337 = vmatprep.mubr.f32.mxu0 %v1336
    %v1338 = vand.u32 %v974, 4294901760
    %v1339 = vsub.f32 %v974, %v1338
    %1340 = vmatmul.mubr.f32.gmra.mxu0 %v1339
    %v1341 = vpop.f32.mrf.mxu0
    %v1342 = vadd.f32 %v1232, %v1341
    %v1343 = vpop.f32.mrf.mxu0
    %1344 = vdwg.mxu0
    %1345 = vmatprep.subr.mxu0 0.0
    %v1346 = vand.u32 %v57, 4294901760
    %1347 = vmatpush1.msra.mxu0 %v1346
    %1348 = vmatprep.subr.mxu0 0.0
    %v1349 = vand.u32 %v56, 4294901760
    %1350 = vmatpush1.msra.mxu0 %v1349
    %1351 = vmatprep.subr.mxu0 0.0
    %v1352 = vand.u32 %v55, 4294901760
    %1353 = vmatpush1.msra.mxu0 %v1352
    %1354 = vmatprep.subr.mxu0 0.0
    %v1355 = vand.u32 %v54, 4294901760
    %1356 = vmatpush1.msra.mxu0 %v1355
    %1357 = vmatprep.subr.mxu0 0.0
    %v1358 = vand.u32 %v53, 4294901760
    %1359 = vmatpush1.msra.mxu0 %v1358
    %1360 = vmatprep.subr.mxu0 0.0
    %v1361 = vand.u32 %v52, 4294901760
    %1362 = vmatpush1.msra.mxu0 %v1361
    %1363 = vmatprep.subr.mxu0 0.0
    %v1364 = vand.u32 %v51, 4294901760
    %1365 = vmatpush1.msra.mxu0 %v1364
    %1366 = vmatprep.subr.mxu0 0.0
    %v1367 = vand.u32 %v50, 4294901760
    %1368 = vmatpush1.msra.mxu0 %v1367
    %1369 = vmatprep.subr.mxu0 0.0
    %v1370 = vand.u32 %v49, 4294901760
    %1371 = vmatpush1.msra.mxu0 %v1370
    %1372 = vmatprep.subr.mxu0 0.0
    %v1373 = vand.u32 %v48, 4294901760
    %1374 = vmatpush1.msra.mxu0 %v1373
    %1375 = vmatprep.subr.mxu0 0.0
    %v1376 = vand.u32 %v47, 4294901760
    %1377 = vmatpush1.msra.mxu0 %v1376
    %1378 = vmatprep.subr.mxu0 0.0
    %v1379 = vand.u32 %v46, 4294901760
    %1380 = vmatpush1.msra.mxu0 %v1379
    %1381 = vmatprep.subr.mxu0 0.0
    %v1382 = vand.u32 %v45, 4294901760
    %1383 = vmatpush1.msra.mxu0 %v1382
    %1384 = vmatprep.subr.mxu0 0.0
    %v1385 = vand.u32 %v44, 4294901760
    %1386 = vmatpush1.msra.mxu0 %v1385
    %1387 = vmatprep.subr.mxu0 0.0
    %v1388 = vand.u32 %v43, 4294901760
    %1389 = vmatpush1.msra.mxu0 %v1388
    %1390 = vmatprep.subr.mxu0 0.0
    %v1391 = vand.u32 %v42, 4294901760
    %1392 = vmatpush1.msra.mxu0 %v1391
    %1393 = vmatprep.subr.mxu0 0.0
    %1394 = vmatpush2.msra.mxu0 0.0
    %1395 = vmatprep.subr.mxu0 0.0
    %1396 = vmatpush2.msra.mxu0 0.0
    %1397 = vmatprep.subr.mxu0 0.0
    %1398 = vmatpush2.msra.mxu0 0.0
    %1399 = vmatprep.subr.mxu0 0.0
    %1400 = vmatpush2.msra.mxu0 0.0
    %1401 = vmatprep.subr.mxu0 0.0
    %1402 = vmatpush2.msra.mxu0 0.0
    %1403 = vmatprep.subr.mxu0 0.0
    %1404 = vmatpush2.msra.mxu0 0.0
    %1405 = vmatprep.subr.mxu0 0.0
    %1406 = vmatpush2.msra.mxu0 0.0
    %1407 = vmatprep.subr.mxu0 0.0
    %1408 = vmatpush2.msra.mxu0 0.0
    %1409 = vmatprep.subr.mxu0 0.0
    %1410 = vmatpush2.msra.mxu0 0.0
    %1411 = vmatprep.subr.mxu0 0.0
    %1412 = vmatpush2.msra.mxu0 0.0
    %1413 = vmatprep.subr.mxu0 0.0
    %1414 = vmatpush2.msra.mxu0 0.0
    %1415 = vmatprep.subr.mxu0 0.0
    %1416 = vmatpush2.msra.mxu0 0.0
    %1417 = vmatprep.subr.mxu0 0.0
    %1418 = vmatpush2.msra.mxu0 0.0
    %1419 = vmatprep.subr.mxu0 0.0
    %1420 = vmatpush2.msra.mxu0 0.0
    %1421 = vmatprep.subr.mxu0 0.0
    %v1422 = vand.u32 %v59, 4294901760
    %1423 = vmatpush2.msra.mxu0 %v1422
    %1424 = vmatprep.subr.mxu0 0.0
    %v1425 = vand.u32 %v58, 4294901760
    %1426 = vmatpush2.msra.mxu0 %v1425
    %v1427 = vand.u32 %v64, 4294901760
    %v1428 = vsub.f32 %v64, %v1427
    %v1429 = vand.u32 %v1428, 4294901760
    %1430 = vmatprep.mubr.f32.mxu0 %v1429
    %v1431 = vand.u32 %v974, 4294901760
    %v1432 = vsub.f32 %v974, %v1431
    %v1433 = vand.u32 %v1432, 4294901760
    %1434 = vmatmul.mubr.f32.gmra.mxu0 %v1433
    %v1435 = vpop.f32.mrf.mxu0
    %v1436 = vadd.f32 %v1342, %v1435
    %v1437 = vpop.f32.mrf.mxu0
    %1438 = vdwg.mxu0
    %1439 = vmatprep.subr.mxu0 0.0
    %v1440 = vand.u32 %v57, 4294901760
    %v1441 = vsub.f32 %v57, %v1440
    %v1442 = vand.u32 %v1441, 4294901760
    %1443 = vmatpush1.msra.mxu0 %v1442
    %1444 = vmatprep.subr.mxu0 0.0
    %v1445 = vand.u32 %v56, 4294901760
    %v1446 = vsub.f32 %v56, %v1445
    %v1447 = vand.u32 %v1446, 4294901760
    %1448 = vmatpush1.msra.mxu0 %v1447
    %1449 = vmatprep.subr.mxu0 0.0
    %v1450 = vand.u32 %v55, 4294901760
    %v1451 = vsub.f32 %v55, %v1450
    %v1452 = vand.u32 %v1451, 4294901760
    %1453 = vmatpush1.msra.mxu0 %v1452
    %1454 = vmatprep.subr.mxu0 0.0
    %v1455 = vand.u32 %v54, 4294901760
    %v1456 = vsub.f32 %v54, %v1455
    %v1457 = vand.u32 %v1456, 4294901760
    %1458 = vmatpush1.msra.mxu0 %v1457
    %1459 = vmatprep.subr.mxu0 0.0
    %v1460 = vand.u32 %v53, 4294901760
    %v1461 = vsub.f32 %v53, %v1460
    %v1462 = vand.u32 %v1461, 4294901760
    %1463 = vmatpush1.msra.mxu0 %v1462
    %1464 = vmatprep.subr.mxu0 0.0
    %v1465 = vand.u32 %v52, 4294901760
    %v1466 = vsub.f32 %v52, %v1465
    %v1467 = vand.u32 %v1466, 4294901760
    %1468 = vmatpush1.msra.mxu0 %v1467
    %1469 = vmatprep.subr.mxu0 0.0
    %v1470 = vand.u32 %v51, 4294901760
    %v1471 = vsub.f32 %v51, %v1470
    %v1472 = vand.u32 %v1471, 4294901760
    %1473 = vmatpush1.msra.mxu0 %v1472
    %1474 = vmatprep.subr.mxu0 0.0
    %v1475 = vand.u32 %v50, 4294901760
    %v1476 = vsub.f32 %v50, %v1475
    %v1477 = vand.u32 %v1476, 4294901760
    %1478 = vmatpush1.msra.mxu0 %v1477
    %1479 = vmatprep.subr.mxu0 0.0
    %v1480 = vand.u32 %v49, 4294901760
    %v1481 = vsub.f32 %v49, %v1480
    %v1482 = vand.u32 %v1481, 4294901760
    %1483 = vmatpush1.msra.mxu0 %v1482
    %1484 = vmatprep.subr.mxu0 0.0
    %v1485 = vand.u32 %v48, 4294901760
    %v1486 = vsub.f32 %v48, %v1485
    %v1487 = vand.u32 %v1486, 4294901760
    %1488 = vmatpush1.msra.mxu0 %v1487
    %1489 = vmatprep.subr.mxu0 0.0
    %v1490 = vand.u32 %v47, 4294901760
    %v1491 = vsub.f32 %v47, %v1490
    %v1492 = vand.u32 %v1491, 4294901760
    %1493 = vmatpush1.msra.mxu0 %v1492
    %1494 = vmatprep.subr.mxu0 0.0
    %v1495 = vand.u32 %v46, 4294901760
    %v1496 = vsub.f32 %v46, %v1495
    %v1497 = vand.u32 %v1496, 4294901760
    %1498 = vmatpush1.msra.mxu0 %v1497
    %1499 = vmatprep.subr.mxu0 0.0
    %v1500 = vand.u32 %v45, 4294901760
    %v1501 = vsub.f32 %v45, %v1500
    %v1502 = vand.u32 %v1501, 4294901760
    %1503 = vmatpush1.msra.mxu0 %v1502
    %1504 = vmatprep.subr.mxu0 0.0
    %v1505 = vand.u32 %v44, 4294901760
    %v1506 = vsub.f32 %v44, %v1505
    %v1507 = vand.u32 %v1506, 4294901760
    %1508 = vmatpush1.msra.mxu0 %v1507
    %1509 = vmatprep.subr.mxu0 0.0
    %v1510 = vand.u32 %v43, 4294901760
    %v1511 = vsub.f32 %v43, %v1510
    %v1512 = vand.u32 %v1511, 4294901760
    %1513 = vmatpush1.msra.mxu0 %v1512
    %1514 = vmatprep.subr.mxu0 0.0
    %v1515 = vand.u32 %v42, 4294901760
    %v1516 = vsub.f32 %v42, %v1515
    %v1517 = vand.u32 %v1516, 4294901760
    %1518 = vmatpush1.msra.mxu0 %v1517
    %1519 = vmatprep.subr.mxu0 0.0
    %1520 = vmatpush2.msra.mxu0 0.0
    %1521 = vmatprep.subr.mxu0 0.0
    %1522 = vmatpush2.msra.mxu0 0.0
    %1523 = vmatprep.subr.mxu0 0.0
    %1524 = vmatpush2.msra.mxu0 0.0
    %1525 = vmatprep.subr.mxu0 0.0
    %1526 = vmatpush2.msra.mxu0 0.0
    %1527 = vmatprep.subr.mxu0 0.0
    %1528 = vmatpush2.msra.mxu0 0.0
    %1529 = vmatprep.subr.mxu0 0.0
    %1530 = vmatpush2.msra.mxu0 0.0
    %1531 = vmatprep.subr.mxu0 0.0
    %1532 = vmatpush2.msra.mxu0 0.0
    %1533 = vmatprep.subr.mxu0 0.0
    %1534 = vmatpush2.msra.mxu0 0.0
    %1535 = vmatprep.subr.mxu0 0.0
    %1536 = vmatpush2.msra.mxu0 0.0
    %1537 = vmatprep.subr.mxu0 0.0
    %1538 = vmatpush2.msra.mxu0 0.0
    %1539 = vmatprep.subr.mxu0 0.0
    %1540 = vmatpush2.msra.mxu0 0.0
    %1541 = vmatprep.subr.mxu0 0.0
    %1542 = vmatpush2.msra.mxu0 0.0
    %1543 = vmatprep.subr.mxu0 0.0
    %1544 = vmatpush2.msra.mxu0 0.0
    %1545 = vmatprep.subr.mxu0 0.0
    %1546 = vmatpush2.msra.mxu0 0.0
    %1547 = vmatprep.subr.mxu0 0.0
    %v1548 = vand.u32 %v59, 4294901760
    %v1549 = vsub.f32 %v59, %v1548
    %v1550 = vand.u32 %v1549, 4294901760
    %1551 = vmatpush2.msra.mxu0 %v1550
    %1552 = vmatprep.subr.mxu0 0.0
    %v1553 = vand.u32 %v58, 4294901760
    %v1554 = vsub.f32 %v58, %v1553
    %v1555 = vand.u32 %v1554, 4294901760
    %1556 = vmatpush2.msra.mxu0 %v1555
    %v1557 = vand.u32 %v64, 4294901760
    %1558 = vmatprep.mubr.f32.mxu0 %v1557
    %v1559 = vand.u32 %v974, 4294901760
    %1560 = vmatmul.mubr.f32.gmra.mxu0 %v1559
    %v1561 = vpop.f32.mrf.mxu0
    %v1562 = vadd.f32 %v1436, %v1561
    %v1563 = vpop.f32.mrf.mxu0
    %1564 = vdwg.mxu0
    %1565 = vmatprep.subr.mxu0 0.0
    %v1566 = vand.u32 %v57, 4294901760
    %1567 = vmatpush1.msra.mxu0 %v1566
    %1568 = vmatprep.subr.mxu0 0.0
    %v1569 = vand.u32 %v56, 4294901760
    %1570 = vmatpush1.msra.mxu0 %v1569
    %1571 = vmatprep.subr.mxu0 0.0
    %v1572 = vand.u32 %v55, 4294901760
    %1573 = vmatpush1.msra.mxu0 %v1572
    %1574 = vmatprep.subr.mxu0 0.0
    %v1575 = vand.u32 %v54, 4294901760
    %1576 = vmatpush1.msra.mxu0 %v1575
    %1577 = vmatprep.subr.mxu0 0.0
    %v1578 = vand.u32 %v53, 4294901760
    %1579 = vmatpush1.msra.mxu0 %v1578
    %1580 = vmatprep.subr.mxu0 0.0
    %v1581 = vand.u32 %v52, 4294901760
    %1582 = vmatpush1.msra.mxu0 %v1581
    %1583 = vmatprep.subr.mxu0 0.0
    %v1584 = vand.u32 %v51, 4294901760
    %1585 = vmatpush1.msra.mxu0 %v1584
    %1586 = vmatprep.subr.mxu0 0.0
    %v1587 = vand.u32 %v50, 4294901760
    %1588 = vmatpush1.msra.mxu0 %v1587
    %1589 = vmatprep.subr.mxu0 0.0
    %v1590 = vand.u32 %v49, 4294901760
    %1591 = vmatpush1.msra.mxu0 %v1590
    %1592 = vmatprep.subr.mxu0 0.0
    %v1593 = vand.u32 %v48, 4294901760
    %1594 = vmatpush1.msra.mxu0 %v1593
    %1595 = vmatprep.subr.mxu0 0.0
    %v1596 = vand.u32 %v47, 4294901760
    %1597 = vmatpush1.msra.mxu0 %v1596
    %1598 = vmatprep.subr.mxu0 0.0
    %v1599 = vand.u32 %v46, 4294901760
    %1600 = vmatpush1.msra.mxu0 %v1599
    %1601 = vmatprep.subr.mxu0 0.0
    %v1602 = vand.u32 %v45, 4294901760
    %1603 = vmatpush1.msra.mxu0 %v1602
    %1604 = vmatprep.subr.mxu0 0.0
    %v1605 = vand.u32 %v44, 4294901760
    %1606 = vmatpush1.msra.mxu0 %v1605
    %1607 = vmatprep.subr.mxu0 0.0
    %v1608 = vand.u32 %v43, 4294901760
    %1609 = vmatpush1.msra.mxu0 %v1608
    %1610 = vmatprep.subr.mxu0 0.0
    %v1611 = vand.u32 %v42, 4294901760
    %1612 = vmatpush1.msra.mxu0 %v1611
    %1613 = vmatprep.subr.mxu0 0.0
    %1614 = vmatpush2.msra.mxu0 0.0
    %1615 = vmatprep.subr.mxu0 0.0
    %1616 = vmatpush2.msra.mxu0 0.0
    %1617 = vmatprep.subr.mxu0 0.0
    %1618 = vmatpush2.msra.mxu0 0.0
    %1619 = vmatprep.subr.mxu0 0.0
    %1620 = vmatpush2.msra.mxu0 0.0
    %1621 = vmatprep.subr.mxu0 0.0
    %1622 = vmatpush2.msra.mxu0 0.0
    %1623 = vmatprep.subr.mxu0 0.0
    %1624 = vmatpush2.msra.mxu0 0.0
    %1625 = vmatprep.subr.mxu0 0.0
    %1626 = vmatpush2.msra.mxu0 0.0
    %1627 = vmatprep.subr.mxu0 0.0
    %1628 = vmatpush2.msra.mxu0 0.0
    %1629 = vmatprep.subr.mxu0 0.0
    %1630 = vmatpush2.msra.mxu0 0.0
    %1631 = vmatprep.subr.mxu0 0.0
    %1632 = vmatpush2.msra.mxu0 0.0
    %1633 = vmatprep.subr.mxu0 0.0
    %1634 = vmatpush2.msra.mxu0 0.0
    %1635 = vmatprep.subr.mxu0 0.0
    %1636 = vmatpush2.msra.mxu0 0.0
    %1637 = vmatprep.subr.mxu0 0.0
    %1638 = vmatpush2.msra.mxu0 0.0
    %1639 = vmatprep.subr.mxu0 0.0
    %1640 = vmatpush2.msra.mxu0 0.0
    %1641 = vmatprep.subr.mxu0 0.0
    %v1642 = vand.u32 %v59, 4294901760
    %1643 = vmatpush2.msra.mxu0 %v1642
    %1644 = vmatprep.subr.mxu0 0.0
    %v1645 = vand.u32 %v58, 4294901760
    %1646 = vmatpush2.msra.mxu0 %v1645
    %v1647 = vand.u32 %v64, 4294901760
    %1648 = vmatprep.mubr.f32.mxu0 %v1647
    %v1649 = vand.u32 %v974, 4294901760
    %1650 = vmatmul.mubr.f32.gmra.mxu0 %v1649
    %v1651 = vpop.f32.mrf.mxu0
    %v1652 = vadd.f32 %v1562, %v1651
    %v1653 = vpop.f32.mrf.mxu0
    %1654 = vdwg.mxu0
    %vm1655 = vcmask 123904
    %1656 = vst.msk [vmem:[#allocation7] sm:$0x3] %vm1655, %v1652
    // Predicated region
    $region18: #{_cond_linear_packed.1} parent=1 // pred_check
      _
    $region19: #{_cond_linear_packed.1} parent=1 // pred_check_branch
      %1658 = sbr.rel (0) target = $region21
    $region20: #{_cond_linear_packed.1} parent=1 // pred_region
      %s1660 = ssub.s32 32, 32
      %1661 = vsyncadd [#allocation4], %s1660
      %s1663 = sshll.u32 [#allocation7], 4
      %s1664 = int_to_ptr.vmem [resolvable:$true] %s1663
      %1666 = dma.vmem_to_hbm [thread:$0]  %s1664, 32, %s2, [#allocation4]
    $region21: #{_cond_linear_packed.1} parent=1 // pred_fallthru
      _
    // Predicated region
    $region22: #{_cond_linear_packed.1} parent=1 // pred_check
      _
    $region23: #{_cond_linear_packed.1} parent=1 // pred_check_branch
      %1668 = sbr.rel (0) target = $region25
    $region24: #{_cond_linear_packed.1} parent=1 // pred_region
      %1669 = dma.done [#allocation4], 32
    $region25: #{_cond_linear_packed.1} parent=1 // pred_fallthru
      _
    %1670 = vsyncpa [#allocation3], 1
    %1671 = vsyncpa [#allocation6], 1
    %1672 = vsyncpa [#allocation4], 1

</llo_original>
